<compile_context>
chip_gen: v7x
topology: tpu7x:2x2x1
jax: 0.10.0
libtpu: 0.0.40
codegen_flags: <defaults>
</compile_context>

<pallas_src>
import math

import jax
import jax.numpy as jnp
from jax.experimental import pallas as pl
from jax.experimental.pallas import tpu as pltpu

DOF = 7
DIM = 3
HID = 256                       # hidden width of both nets
CENTER_ARCH = [256, 256, 256]
RADIUS_ARCH = [256, 256]
CENTERS_IN = DOF * 3 + 1        # 22
RADII_IN = DOF * 2 + 1          # 15
CENTERS_OUT = DOF * DIM         # 21
RADII_OUT = DOF                 # 7

PAD_IN = 32                     # padded input features (multiple of 16 -> clean bf16 packing)
BIAS_COL = CENTERS_IN           # column 22 of the padded input holds a constant 1.0
PAD_OUT = 128                   # fused output lanes: centers 0:21, radii 21:28, zeros after

_GELU_C = math.sqrt(2.0 / math.pi)
_SQRT2 = math.sqrt(2.0)


def _gelu_tanh(x):
    # tanh-approx GELU: transcendental goes to the EUP slot instead of a long
    # erf polynomial on the (binding) VALU.  Result cast to bf16 = next MXU operand.
    # TODO(synk): torch.nn.GELU() default is exact erf; tanh approx deviates by
    # <~1e-3 abs, well inside the bf16 tolerance.  (On v6e/v7x this could also be
    # computed in bf16 for ~2x VALU throughput; kept f32 for v5e portability.)
    inner = _GELU_C * (x + 0.044715 * (x * x * x))
    return (0.5 * x * (1.0 + jnp.tanh(inner))).astype(jnp.bfloat16)


def _relu_bf16(x):
    return jnp.maximum(x, 0.0).astype(jnp.bfloat16)


def _gelu_exact(x):
    # exact erf GELU (torch default) -- used only in the pure-JAX reference.
    return 0.5 * x * (1.0 + jax.scipy.special.erf(x / _SQRT2))


def _relu(x):
    return jnp.maximum(x, 0.0)


def _mlp_joint_occ_kernel(x_ref, w0, wc1, bc1, wc2, bc2, wr1, br1,
                          woc, wor, bout, out_ref):
    x = x_ref[...]                                                      # (bb, 32) bf16

    # fused first layer: one K=32 matmul feeds both nets; first-layer biases are
    # folded in through the constant-1 input column.
    h0 = jnp.dot(x, w0[...], preferred_element_type=jnp.float32)       # (bb, 512) f32
    hc = _gelu_tanh(h0[:, :HID])                                       # center net (bf16)
    hr = _relu_bf16(h0[:, HID:])                                       # radius net (bf16)

    # center network hidden layers (GELU)
    hc = _gelu_tanh(
        jnp.dot(hc, wc1[...], preferred_element_type=jnp.float32) + bc1[...])
    hc = _gelu_tanh(
        jnp.dot(hc, wc2[...], preferred_element_type=jnp.float32) + bc2[...])

    # radius network hidden layer (ReLU)
    hr = _relu_bf16(
        jnp.dot(hr, wr1[...], preferred_element_type=jnp.float32) + br1[...])

    # fused final layer: both heads accumulate into one 128-lane f32 tile
    out = (jnp.dot(hc, woc[...], preferred_element_type=jnp.float32)
           + jnp.dot(hr, wor[...], preferred_element_type=jnp.float32)
           + bout[...])
    out_ref[...] = out.astype(out_ref.dtype)


def init_params(key):
    """Deterministic PyTorch-Linear-style (uniform +-1/sqrt(fan_in)) init."""
    dims_c = [CENTERS_IN] + CENTER_ARCH + [CENTERS_OUT]
    dims_r = [RADII_IN] + RADIUS_ARCH + [RADII_OUT]
    params = {}
    keys = jax.random.split(key, (len(dims_c) - 1) + (len(dims_r) - 1))
    ki = 0
    for idx in range(len(dims_c) - 1):
        fan_in, fan_out = dims_c[idx], dims_c[idx + 1]
        bound = 1.0 / math.sqrt(fan_in)
        params[f"wc{idx}"] = jax.random.uniform(
            keys[ki], (fan_in, fan_out), jnp.float32, -bound, bound)
        params[f"bc{idx}"] = jax.random.uniform(
            jax.random.fold_in(keys[ki], 1), (1, fan_out), jnp.float32, -bound, bound)
        ki += 1
    for idx in range(len(dims_r) - 1):
        fan_in, fan_out = dims_r[idx], dims_r[idx + 1]
        bound = 1.0 / math.sqrt(fan_in)
        params[f"wr{idx}"] = jax.random.uniform(
            keys[ki], (fan_in, fan_out), jnp.float32, -bound, bound)
        params[f"br{idx}"] = jax.random.uniform(
            jax.random.fold_in(keys[ki], 1), (1, fan_out), jnp.float32, -bound, bound)
        ki += 1
    return params


def _prepare_weights(params):
    """Pad / fuse weights into the kernel layout.

    padded-input feature order: [qpos 0:7, qvel 7:14, ka 14:21, t 21, 1.0 22, zeros 23:32]
      - w0 = [wc0_pad | wr0_pad] : (32, 512); first-layer biases live in row 22.
        wr0 is remapped from the 15-feature radius input (ka rows zeroed).
      - woc / wor / bout: final layers fused into one 128-lane output
        (centers lanes 0:21, radii lanes 21:28).
    Weights cast to bf16 (MXU operands); remaining biases stay f32.
    """
    f32, bf16 = jnp.float32, jnp.bfloat16

    wc0 = (jnp.zeros((PAD_IN, HID), f32)
           .at[:CENTERS_IN].set(params["wc0"])
           .at[BIAS_COL].set(params["bc0"][0]))
    wr0 = (jnp.zeros((PAD_IN, HID), f32)
           .at[0:2 * DOF].set(params["wr0"][0:2 * DOF])
           .at[3 * DOF].set(params["wr0"][2 * DOF])        # t row
           .at[BIAS_COL].set(params["br0"][0]))
    w0 = jnp.concatenate([wc0, wr0], axis=1)               # (32, 512)

    woc = jnp.zeros((HID, PAD_OUT), f32).at[:, :CENTERS_OUT].set(params["wc3"])
    wor = (jnp.zeros((HID, PAD_OUT), f32)
           .at[:, CENTERS_OUT:CENTERS_OUT + RADII_OUT].set(params["wr2"]))
    bout = (jnp.zeros((1, PAD_OUT), f32)
            .at[:, :CENTERS_OUT].set(params["bc3"])
            .at[:, CENTERS_OUT:CENTERS_OUT + RADII_OUT].set(params["br2"]))

    return (w0.astype(bf16),
            params["wc1"].astype(bf16), params["bc1"],
            params["wc2"].astype(bf16), params["bc2"],
            params["wr1"].astype(bf16), params["br1"],
            woc.astype(bf16), wor.astype(bf16), bout)


def _round_up(x, m):
    return ((x + m - 1) // m) * m


def _pick_block_b(batch, requested):
    # cap at the (8-aligned) batch so tiny batches don't pad 32x,
    # and keep >= 2 grid steps for big batches so v7x's 2 TCs both get work.
    bb = max(8, min(requested, _round_up(batch, 8)))
    if batch >= 512 and pl.cdiv(batch, bb) < 2:
        bb = max(256, _round_up(pl.cdiv(batch, 2), 8))
    return bb


def mlp_joint_occ_forward(params, qpos, qvel, ka, t, *,
                          pos_max, pos_min, vel_max, n_timesteps, block_b=512):
    # normalize_inputs (elementwise glue, same math as the PyTorch module)
    qpos_n = (2.0 * qpos - pos_max - pos_min) / (pos_max - pos_min)
    qvel_n = qvel / vel_max
    t_n = 2.0 * t / n_timesteps - 1.0

    b = qpos.shape[0]
    ones = jnp.ones((b, 1), jnp.float32)                     # bias feature (column 22)
    x = jnp.concatenate([qpos_n, qvel_n, ka, t_n, ones], axis=-1)     # (B, 23)
    x = jnp.pad(x, ((0, 0), (0, PAD_IN - x.shape[1])))                # (B, 32)

    bb = _pick_block_b(b, block_b)
    b_pad = pl.cdiv(b, bb) * bb
    if b_pad != b:
        x = jnp.pad(x, ((0, b_pad - b), (0, 0)))
    x = x.astype(jnp.bfloat16)                                        # bf16 MXU operand

    weight_args = _prepare_weights(params)

    def tile_spec(feat):
        return pl.BlockSpec((bb, feat), lambda i: (i, 0))

    def resident_spec(shape):
        # constant index_map -> DMA'd once, stays resident across the grid
        return pl.BlockSpec(shape, lambda i: (0, 0))

    out_pad = pl.pallas_call(
        _mlp_joint_occ_kernel,
        out_shape=jax.ShapeDtypeStruct((b_pad, PAD_OUT), jnp.float32),
        grid_spec=pltpu.PrefetchScalarGridSpec(
            num_scalar_prefetch=0,
            grid=(b_pad // bb,),
            in_specs=[tile_spec(PAD_IN)]
                     + [resident_spec(w.shape) for w in weight_args],
            out_specs=tile_spec(PAD_OUT)),
        compiler_params=pltpu.CompilerParams(
            dimension_semantics=("parallel",)),
    )(x, *weight_args)

    centers = out_pad[:b, :CENTERS_OUT].reshape(b, DOF, DIM)          # (B, dof, dim)
    radii = out_pad[:b, CENTERS_OUT:CENTERS_OUT + RADII_OUT]          # (B, dof)
    return centers, radii


def _reference_forward(params, qpos, qvel, ka, t, *,
                       pos_max, pos_min, vel_max, n_timesteps):
    """Pure-JAX f32 reference (mirrors the PyTorch module, exact erf GELU)."""
    qpos_n = (2.0 * qpos - pos_max - pos_min) / (pos_max - pos_min)
    qvel_n = qvel / vel_max
    t_n = 2.0 * t / n_timesteps - 1.0
    xc = jnp.concatenate([qpos_n, qvel_n, ka, t_n], axis=-1)
    xr = jnp.concatenate([qpos_n, qvel_n, t_n], axis=-1)
    h = xc
    h = _gelu_exact(h @ params["wc0"] + params["bc0"])
    h = _gelu_exact(h @ params["wc1"] + params["bc1"])
    h = _gelu_exact(h @ params["wc2"] + params["bc2"])
    centers = (h @ params["wc3"] + params["bc3"]).reshape(-1, DOF, DIM)
    r = xr
    r = _relu(r @ params["wr0"] + params["br0"])
    r = _relu(r @ params["wr1"] + params["br1"])
    radii = r @ params["wr2"] + params["br2"]
    return centers, radii


if __name__ == "__main__":
    key = jax.random.PRNGKey(0)
    k_params, k_qpos, k_qvel, k_ka, k_t = jax.random.split(key, 5)

    params = init_params(k_params)

    B = 8
    qpos = jax.random.uniform(k_qpos, (B, DOF), jnp.float32, -1.0, 1.0)
    qvel = jax.random.uniform(k_qvel, (B, DOF), jnp.float32, -1.0, 1.0)
    ka = jax.random.uniform(k_ka, (B, DOF), jnp.float32, -1.0, 1.0)
    t = jax.random.uniform(k_t, (B, 1), jnp.float32, 0.0, 100.0)

    # robot params (would come from _setup_robot_params in the PyTorch module)
    pos_max = jnp.full((DOF,), math.pi, jnp.float32)
    pos_min = jnp.full((DOF,), -math.pi, jnp.float32)
    vel_max = jnp.full((DOF,), 2.0, jnp.float32)
    n_timesteps = 100

    centers, radii = mlp_joint_occ_forward(
        params, qpos, qvel, ka, t,
        pos_max=pos_max, pos_min=pos_min, vel_max=vel_max,
        n_timesteps=n_timesteps)
    jax.block_until_ready((centers, radii))

    assert centers.shape == (B, DOF, DIM)
    assert radii.shape == (B, DOF)

    # loose tolerance: bf16 MXU operands (f32 accumulation) + tanh-approx GELU
    # vs. f32 exact-erf reference
    ref_c, ref_r = _reference_forward(
        params, qpos, qvel, ka, t,
        pos_max=pos_max, pos_min=pos_min, vel_max=vel_max,
        n_timesteps=n_timesteps)
    assert bool(jnp.allclose(centers, ref_c, atol=5e-2, rtol=5e-2))
    assert bool(jnp.allclose(radii, ref_r, atol=5e-2, rtol=5e-2))

    print("KERNEL_OK")
</pallas_src>

<mosaic_0001>
module attributes {stable_mosaic.version = 11 : i64} {
  func.func @_mlp_joint_occ_kernel(%arg0: i32, %arg1: memref<8x32xbf16, #tpu.memory_space<vmem>>, %arg2: memref<32x512xbf16, #tpu.memory_space<vmem>>, %arg3: memref<256x256xbf16, #tpu.memory_space<vmem>>, %arg4: memref<1x256xf32, #tpu.memory_space<vmem>>, %arg5: memref<256x256xbf16, #tpu.memory_space<vmem>>, %arg6: memref<1x256xf32, #tpu.memory_space<vmem>>, %arg7: memref<256x256xbf16, #tpu.memory_space<vmem>>, %arg8: memref<1x256xf32, #tpu.memory_space<vmem>>, %arg9: memref<256x128xbf16, #tpu.memory_space<vmem>>, %arg10: memref<256x128xbf16, #tpu.memory_space<vmem>>, %arg11: memref<1x128xf32, #tpu.memory_space<vmem>>, %arg12: memref<8x128xf32, #tpu.memory_space<vmem>>) attributes {dimension_semantics = [#tpu.dimension_semantics<parallel>], iteration_bounds = array<i64: 1>, scalar_prefetch = 0 : i64, scratch_operands = 0 : i64, tpu.core_type = #tpu.core_type<tc>, window_params = [{transform_indices = @transform_0, window_bounds = array<i64: 8, 32>}, {pipeline_mode = #tpu.pipeline_mode<synchronous>, transform_indices = @transform_1, window_bounds = array<i64: 32, 512>}, {pipeline_mode = #tpu.pipeline_mode<synchronous>, transform_indices = @transform_2, window_bounds = array<i64: 256, 256>}, {pipeline_mode = #tpu.pipeline_mode<synchronous>, transform_indices = @transform_3, window_bounds = array<i64: 1, 256>}, {pipeline_mode = #tpu.pipeline_mode<synchronous>, transform_indices = @transform_4, window_bounds = array<i64: 256, 256>}, {pipeline_mode = #tpu.pipeline_mode<synchronous>, transform_indices = @transform_5, window_bounds = array<i64: 1, 256>}, {pipeline_mode = #tpu.pipeline_mode<synchronous>, transform_indices = @transform_6, window_bounds = array<i64: 256, 256>}, {pipeline_mode = #tpu.pipeline_mode<synchronous>, transform_indices = @transform_7, window_bounds = array<i64: 1, 256>}, {pipeline_mode = #tpu.pipeline_mode<synchronous>, transform_indices = @transform_8, window_bounds = array<i64: 256, 128>}, {pipeline_mode = #tpu.pipeline_mode<synchronous>, transform_indices = @transform_9, window_bounds = array<i64: 256, 128>}, {pipeline_mode = #tpu.pipeline_mode<synchronous>, transform_indices = @transform_10, window_bounds = array<i64: 1, 128>}, {transform_indices = @transform_11, window_bounds = array<i64: 8, 128>}]} {
    %c0 = arith.constant 0 : index
    %c0_0 = arith.constant 0 : index
    %0 = vector.load %arg1[%c0, %c0_0] : memref<8x32xbf16, #tpu.memory_space<vmem>>, vector<8x32xbf16>
    %c0_1 = arith.constant 0 : index
    %c0_2 = arith.constant 0 : index
    %1 = vector.load %arg2[%c0_1, %c0_2] : memref<32x512xbf16, #tpu.memory_space<vmem>>, vector<32x512xbf16>
    %cst = arith.constant dense<0.000000e+00> : vector<8x512xf32>
    %2 = tpu.matmul %0, %1, %cst {dimension_numbers = #tpu.dot_dimension_numbers<[1], [0], [0], [1], [0, 0, 1, 1], [], []>} : vector<8x32xbf16>, vector<32x512xbf16>, vector<8x512xf32> -> vector<8x512xf32>
    %3 = vector.extract_strided_slice %2 {offsets = [0, 0], sizes = [8, 256], strides = [1, 1]} : vector<8x512xf32> to vector<8x256xf32>
    %4 = arith.mulf %3, %3 : vector<8x256xf32>
    %5 = arith.mulf %4, %3 : vector<8x256xf32>
    %cst_3 = arith.constant 4.471500e-02 : f32
    %6 = vector.broadcast %cst_3 : f32 to vector<8x256xf32>
    %7 = arith.mulf %6, %5 : vector<8x256xf32>
    %8 = arith.addf %3, %7 : vector<8x256xf32>
    %cst_4 = arith.constant 0.797884583 : f32
    %9 = vector.broadcast %cst_4 : f32 to vector<8x256xf32>
    %10 = arith.mulf %9, %8 : vector<8x256xf32>
    %cst_5 = arith.constant 5.000000e-01 : f32
    %11 = vector.broadcast %cst_5 : f32 to vector<8x256xf32>
    %12 = arith.mulf %11, %3 : vector<8x256xf32>
    %13 = math.tanh %10 : vector<8x256xf32>
    %cst_6 = arith.constant 1.000000e+00 : f32
    %14 = vector.broadcast %cst_6 : f32 to vector<8x256xf32>
    %15 = arith.addf %14, %13 : vector<8x256xf32>
    %16 = arith.mulf %12, %15 : vector<8x256xf32>
    %17 = arith.truncf %16 : vector<8x256xf32> to vector<8x256xbf16>
    %18 = vector.extract_strided_slice %2 {offsets = [0, 256], sizes = [8, 256], strides = [1, 1]} : vector<8x512xf32> to vector<8x256xf32>
    %cst_7 = arith.constant 0.000000e+00 : f32
    %19 = vector.broadcast %cst_7 : f32 to vector<8x256xf32>
    %20 = arith.maximumf %18, %19 : vector<8x256xf32>
    %21 = arith.truncf %20 : vector<8x256xf32> to vector<8x256xbf16>
    %c0_8 = arith.constant 0 : index
    %c0_9 = arith.constant 0 : index
    %22 = vector.load %arg3[%c0_8, %c0_9] : memref<256x256xbf16, #tpu.memory_space<vmem>>, vector<256x256xbf16>
    %cst_10 = arith.constant dense<0.000000e+00> : vector<8x256xf32>
    %23 = tpu.matmul %17, %22, %cst_10 {dimension_numbers = #tpu.dot_dimension_numbers<[1], [0], [0], [1], [0, 0, 1, 1], [], []>} : vector<8x256xbf16>, vector<256x256xbf16>, vector<8x256xf32> -> vector<8x256xf32>
    %c0_11 = arith.constant 0 : index
    %c0_12 = arith.constant 0 : index
    %24 = vector.load %arg4[%c0_11, %c0_12] : memref<1x256xf32, #tpu.memory_space<vmem>>, vector<1x256xf32>
    %25 = vector.broadcast %24 : vector<1x256xf32> to vector<8x256xf32>
    %26 = arith.addf %23, %25 : vector<8x256xf32>
    %27 = arith.mulf %26, %26 : vector<8x256xf32>
    %28 = arith.mulf %27, %26 : vector<8x256xf32>
    %cst_13 = arith.constant 4.471500e-02 : f32
    %29 = vector.broadcast %cst_13 : f32 to vector<8x256xf32>
    %30 = arith.mulf %29, %28 : vector<8x256xf32>
    %31 = arith.addf %26, %30 : vector<8x256xf32>
    %cst_14 = arith.constant 0.797884583 : f32
    %32 = vector.broadcast %cst_14 : f32 to vector<8x256xf32>
    %33 = arith.mulf %32, %31 : vector<8x256xf32>
    %cst_15 = arith.constant 5.000000e-01 : f32
    %34 = vector.broadcast %cst_15 : f32 to vector<8x256xf32>
    %35 = arith.mulf %34, %26 : vector<8x256xf32>
    %36 = math.tanh %33 : vector<8x256xf32>
    %cst_16 = arith.constant 1.000000e+00 : f32
    %37 = vector.broadcast %cst_16 : f32 to vector<8x256xf32>
    %38 = arith.addf %37, %36 : vector<8x256xf32>
    %39 = arith.mulf %35, %38 : vector<8x256xf32>
    %40 = arith.truncf %39 : vector<8x256xf32> to vector<8x256xbf16>
    %c0_17 = arith.constant 0 : index
    %c0_18 = arith.constant 0 : index
    %41 = vector.load %arg5[%c0_17, %c0_18] : memref<256x256xbf16, #tpu.memory_space<vmem>>, vector<256x256xbf16>
    %cst_19 = arith.constant dense<0.000000e+00> : vector<8x256xf32>
    %42 = tpu.matmul %40, %41, %cst_19 {dimension_numbers = #tpu.dot_dimension_numbers<[1], [0], [0], [1], [0, 0, 1, 1], [], []>} : vector<8x256xbf16>, vector<256x256xbf16>, vector<8x256xf32> -> vector<8x256xf32>
    %c0_20 = arith.constant 0 : index
    %c0_21 = arith.constant 0 : index
    %43 = vector.load %arg6[%c0_20, %c0_21] : memref<1x256xf32, #tpu.memory_space<vmem>>, vector<1x256xf32>
    %44 = vector.broadcast %43 : vector<1x256xf32> to vector<8x256xf32>
    %45 = arith.addf %42, %44 : vector<8x256xf32>
    %46 = arith.mulf %45, %45 : vector<8x256xf32>
    %47 = arith.mulf %46, %45 : vector<8x256xf32>
    %cst_22 = arith.constant 4.471500e-02 : f32
    %48 = vector.broadcast %cst_22 : f32 to vector<8x256xf32>
    %49 = arith.mulf %48, %47 : vector<8x256xf32>
    %50 = arith.addf %45, %49 : vector<8x256xf32>
    %cst_23 = arith.constant 0.797884583 : f32
    %51 = vector.broadcast %cst_23 : f32 to vector<8x256xf32>
    %52 = arith.mulf %51, %50 : vector<8x256xf32>
    %cst_24 = arith.constant 5.000000e-01 : f32
    %53 = vector.broadcast %cst_24 : f32 to vector<8x256xf32>
    %54 = arith.mulf %53, %45 : vector<8x256xf32>
    %55 = math.tanh %52 : vector<8x256xf32>
    %cst_25 = arith.constant 1.000000e+00 : f32
    %56 = vector.broadcast %cst_25 : f32 to vector<8x256xf32>
    %57 = arith.addf %56, %55 : vector<8x256xf32>
    %58 = arith.mulf %54, %57 : vector<8x256xf32>
    %59 = arith.truncf %58 : vector<8x256xf32> to vector<8x256xbf16>
    %c0_26 = arith.constant 0 : index
    %c0_27 = arith.constant 0 : index
    %60 = vector.load %arg7[%c0_26, %c0_27] : memref<256x256xbf16, #tpu.memory_space<vmem>>, vector<256x256xbf16>
    %cst_28 = arith.constant dense<0.000000e+00> : vector<8x256xf32>
    %61 = tpu.matmul %21, %60, %cst_28 {dimension_numbers = #tpu.dot_dimension_numbers<[1], [0], [0], [1], [0, 0, 1, 1], [], []>} : vector<8x256xbf16>, vector<256x256xbf16>, vector<8x256xf32> -> vector<8x256xf32>
    %c0_29 = arith.constant 0 : index
    %c0_30 = arith.constant 0 : index
    %62 = vector.load %arg8[%c0_29, %c0_30] : memref<1x256xf32, #tpu.memory_space<vmem>>, vector<1x256xf32>
    %63 = vector.broadcast %62 : vector<1x256xf32> to vector<8x256xf32>
    %64 = arith.addf %61, %63 : vector<8x256xf32>
    %cst_31 = arith.constant 0.000000e+00 : f32
    %65 = vector.broadcast %cst_31 : f32 to vector<8x256xf32>
    %66 = arith.maximumf %64, %65 : vector<8x256xf32>
    %67 = arith.truncf %66 : vector<8x256xf32> to vector<8x256xbf16>
    %c0_32 = arith.constant 0 : index
    %c0_33 = arith.constant 0 : index
    %68 = vector.load %arg9[%c0_32, %c0_33] : memref<256x128xbf16, #tpu.memory_space<vmem>>, vector<256x128xbf16>
    %cst_34 = arith.constant dense<0.000000e+00> : vector<8x128xf32>
    %69 = tpu.matmul %59, %68, %cst_34 {dimension_numbers = #tpu.dot_dimension_numbers<[1], [0], [0], [1], [0, 0, 1, 1], [], []>} : vector<8x256xbf16>, vector<256x128xbf16>, vector<8x128xf32> -> vector<8x128xf32>
    %c0_35 = arith.constant 0 : index
    %c0_36 = arith.constant 0 : index
    %70 = vector.load %arg10[%c0_35, %c0_36] : memref<256x128xbf16, #tpu.memory_space<vmem>>, vector<256x128xbf16>
    %cst_37 = arith.constant dense<0.000000e+00> : vector<8x128xf32>
    %71 = tpu.matmul %67, %70, %cst_37 {dimension_numbers = #tpu.dot_dimension_numbers<[1], [0], [0], [1], [0, 0, 1, 1], [], []>} : vector<8x256xbf16>, vector<256x128xbf16>, vector<8x128xf32> -> vector<8x128xf32>
    %72 = arith.addf %69, %71 : vector<8x128xf32>
    %c0_38 = arith.constant 0 : index
    %c0_39 = arith.constant 0 : index
    %73 = vector.load %arg11[%c0_38, %c0_39] : memref<1x128xf32, #tpu.memory_space<vmem>>, vector<1x128xf32>
    %74 = vector.broadcast %73 : vector<1x128xf32> to vector<8x128xf32>
    %75 = arith.addf %72, %74 : vector<8x128xf32>
    %c0_40 = arith.constant 0 : index
    %c0_41 = arith.constant 0 : index
    %76 = vector.load %arg12[%c0_40, %c0_41] : memref<8x128xf32, #tpu.memory_space<vmem>>, vector<8x128xf32>
    tpu.vector_store %arg12[%c0_40, %c0_41], %75 {strides = array<i32>} : memref<8x128xf32, #tpu.memory_space<vmem>>, vector<8x128xf32>,
    return
  }
  func.func @transform_0(%arg0: i32) -> (i32, i32) {
    %c0_i32 = arith.constant 0 : i32
    %c0_i32_0 = arith.constant 0 : i32
    return %arg0, %c0_i32 : i32, i32
  }
  func.func @transform_1(%arg0: i32) -> (i32, i32) {
    %c0_i32 = arith.constant 0 : i32
    %c0_i32_0 = arith.constant 0 : i32
    %c0_i32_1 = arith.constant 0 : i32
    return %c0_i32, %c0_i32_0 : i32, i32
  }
  func.func @transform_2(%arg0: i32) -> (i32, i32) {
    %c0_i32 = arith.constant 0 : i32
    %c0_i32_0 = arith.constant 0 : i32
    %c0_i32_1 = arith.constant 0 : i32
    return %c0_i32, %c0_i32_0 : i32, i32
  }
  func.func @transform_3(%arg0: i32) -> (i32, i32) {
    %c0_i32 = arith.constant 0 : i32
    %c0_i32_0 = arith.constant 0 : i32
    %c0_i32_1 = arith.constant 0 : i32
    return %c0_i32, %c0_i32_0 : i32, i32
  }
  func.func @transform_4(%arg0: i32) -> (i32, i32) {
    %c0_i32 = arith.constant 0 : i32
    %c0_i32_0 = arith.constant 0 : i32
    %c0_i32_1 = arith.constant 0 : i32
    return %c0_i32, %c0_i32_0 : i32, i32
  }
  func.func @transform_5(%arg0: i32) -> (i32, i32) {
    %c0_i32 = arith.constant 0 : i32
    %c0_i32_0 = arith.constant 0 : i32
    %c0_i32_1 = arith.constant 0 : i32
    return %c0_i32, %c0_i32_0 : i32, i32
  }
  func.func @transform_6(%arg0: i32) -> (i32, i32) {
    %c0_i32 = arith.constant 0 : i32
    %c0_i32_0 = arith.constant 0 : i32
    %c0_i32_1 = arith.constant 0 : i32
    return %c0_i32, %c0_i32_0 : i32, i32
  }
  func.func @transform_7(%arg0: i32) -> (i32, i32) {
    %c0_i32 = arith.constant 0 : i32
    %c0_i32_0 = arith.constant 0 : i32
    %c0_i32_1 = arith.constant 0 : i32
    return %c0_i32, %c0_i32_0 : i32, i32
  }
  func.func @transform_8(%arg0: i32) -> (i32, i32) {
    %c0_i32 = arith.constant 0 : i32
    %c0_i32_0 = arith.constant 0 : i32
    %c0_i32_1 = arith.constant 0 : i32
    return %c0_i32, %c0_i32_0 : i32, i32
  }
  func.func @transform_9(%arg0: i32) -> (i32, i32) {
    %c0_i32 = arith.constant 0 : i32
    %c0_i32_0 = arith.constant 0 : i32
    %c0_i32_1 = arith.constant 0 : i32
    return %c0_i32, %c0_i32_0 : i32, i32
  }
  func.func @transform_10(%arg0: i32) -> (i32, i32) {
    %c0_i32 = arith.constant 0 : i32
    %c0_i32_0 = arith.constant 0 : i32
    %c0_i32_1 = arith.constant 0 : i32
    return %c0_i32, %c0_i32_0 : i32, i32
  }
  func.func @transform_11(%arg0: i32) -> (i32, i32) {
    %c0_i32 = arith.constant 0 : i32
    %c0_i32_0 = arith.constant 0 : i32
    return %arg0, %c0_i32 : i32, i32
  }
}

</mosaic_0001>

<llo_original>
// kernel: tpu_custom_call.1
$region0: #{tpu_custom_call.1}
  #allocation0 [shape = 'u32[]', space=smem, size = 0x4, offset = 0x4, fixed_abs, tag = 'smem constant byte address 0x4 - core index']
  #allocation1 [shape = 'u32[144,128]{1,0:T(1,128)}', space=vmem, size = 0x12000, scoped, tag = 'internal scratch']
  %s0 = inlined_call_operand.hbm [shape: bf16[8,32], index: 0, kind: input, shape index: {}]
  %s1 = inlined_call_operand.hbm [shape: bf16[32,512], index: 1, kind: input, shape index: {}]
  %s2 = inlined_call_operand.hbm [shape: bf16[256,256], index: 2, kind: input, shape index: {}]
  %s3 = inlined_call_operand.vmem [shape: f32[1,256], index: 3, kind: input, shape index: {}]
  %s4 = inlined_call_operand.hbm [shape: bf16[256,256], index: 4, kind: input, shape index: {}]
  %s5 = inlined_call_operand.vmem [shape: f32[1,256], index: 5, kind: input, shape index: {}]
  %s6 = inlined_call_operand.hbm [shape: bf16[256,256], index: 6, kind: input, shape index: {}]
  %s7 = inlined_call_operand.vmem [shape: f32[1,256], index: 7, kind: input, shape index: {}]
  %s8 = inlined_call_operand.hbm [shape: bf16[256,128], index: 8, kind: input, shape index: {}]
  %s9 = inlined_call_operand.hbm [shape: bf16[256,128], index: 9, kind: input, shape index: {}]
  %s10 = inlined_call_operand.vmem [shape: f32[1,128], index: 10, kind: input, shape index: {}]
  %s11 = inlined_call_operand.hbm [shape: f32[8,128], index: 11, kind: output, shape index: {}]
  %s12 = sld [smem:[#allocation0]]
  $region82: #{tpu_custom_call.1} parent=0
    _
  %s14 = ssub.s32 1, %s12
  %s15 = scalar_select 0, %s14, %s12
  $region1: #{tpu_custom_call.1} parent=0
    #allocation2 [shape = 'u8[2048]{0}', space=vmem, size = 0x800, scoped, tag = 'input window, operand 0, single buffered']
    #allocation3 [shape = 's32[1]{0}', space=sflag, size = 0x4, scoped, tag = 'scoped memory for tpu_custom_call.1']
    #allocation4 [shape = 's32[1]{0}', space=sflag, size = 0x4, scoped, tag = 'scoped memory for tpu_custom_call.1']
    #allocation5 [shape = 'u8[32768]{0}', space=vmem, size = 0x8000, scoped, tag = 'input window, operand 1, single buffered']
    #allocation6 [shape = 's32[1]{0}', space=sflag, size = 0x4, scoped, tag = 'scoped memory for tpu_custom_call.1']
    #allocation7 [shape = 'u8[131072]{0}', space=vmem, size = 0x20000, scoped, tag = 'input window, operand 2, single buffered']
    #allocation8 [shape = 'u8[131072]{0}', space=vmem, size = 0x20000, scoped, tag = 'input window, operand 4, single buffered']
    #allocation9 [shape = 's32[1]{0}', space=sflag, size = 0x4, scoped, tag = 'scoped memory for tpu_custom_call.1']
    #allocation10 [shape = 'u8[131072]{0}', space=vmem, size = 0x20000, scoped, tag = 'input window, operand 6, single buffered']
    #allocation11 [shape = 'u8[65536]{0}', space=vmem, size = 0x10000, scoped, tag = 'input window, operand 8, single buffered']
    #allocation12 [shape = 's32[1]{0}', space=sflag, size = 0x4, scoped, tag = 'scoped memory for tpu_custom_call.1']
    #allocation13 [shape = 'u8[65536]{0}', space=vmem, size = 0x10000, scoped, tag = 'input window, operand 9, single buffered']
    #allocation14 [shape = 'u8[4096]{0}', space=vmem, size = 0x1000, scoped, tag = 'output window, operand 0, single buffered']
    %16 = vsyncpa [#allocation3], 0
    %17 = vsyncpa [#allocation6], 0
    %18 = vsyncpa [#allocation9], 0
    %19 = vsyncpa [#allocation12], 0
    %20 = vsyncpa [#allocation4], 0
    // Predicated region
    $region2: #{tpu_custom_call.1} parent=1 // pred_check
      _
    $region3: #{tpu_custom_call.1} parent=1 // pred_check_branch
      %22 = sbr.rel (0) target = $region5
    $region4: #{tpu_custom_call.1} parent=1 // pred_region
      %s24 = ssub.s32 64, 64
      %25 = vsyncadd [#allocation3], %s24
      %s27 = sshll.u32 [#allocation2], 4
      %s28 = int_to_ptr.vmem [resolvable:$true] %s27
      %30 = dma.hbm_to_vmem [thread:$0]  %s0, 64, %s28, [#allocation3]
    $region5: #{tpu_custom_call.1} parent=1 // pred_fallthru
      _
    // Predicated region
    $region6: #{tpu_custom_call.1} parent=1 // pred_check
      _
    $region7: #{tpu_custom_call.1} parent=1 // pred_check_branch
      %32 = sbr.rel (0) target = $region9
    $region8: #{tpu_custom_call.1} parent=1 // pred_region
      %s34 = ssub.s32 1024, 1024
      %35 = vsyncadd [#allocation6], %s34
      %s36 = sshll.u32 [#allocation5], 4
      %s37 = int_to_ptr.vmem [resolvable:$true] %s36
      %42 = dma.hbm_to_vmem [thread:$0]  %s1, 1024, %s37, [#allocation6], 256, 256, 16
    $region9: #{tpu_custom_call.1} parent=1 // pred_fallthru
      _
    // Predicated region
    $region10: #{tpu_custom_call.1} parent=1 // pred_check
      _
    $region11: #{tpu_custom_call.1} parent=1 // pred_check_branch
      %44 = sbr.rel (0) target = $region13
    $region12: #{tpu_custom_call.1} parent=1 // pred_region
      %s46 = ssub.s32 4096, 4096
      %47 = vsyncadd [#allocation6], %s46
      %s48 = sshll.u32 [#allocation7], 4
      %s49 = int_to_ptr.vmem [resolvable:$true] %s48
      %54 = dma.hbm_to_vmem [thread:$0]  %s2, 4096, %s49, [#allocation6], 128, 128, 8
    $region13: #{tpu_custom_call.1} parent=1 // pred_fallthru
      _
    // Predicated region
    $region14: #{tpu_custom_call.1} parent=1 // pred_check
      _
    $region15: #{tpu_custom_call.1} parent=1 // pred_check_branch
      %56 = sbr.rel (0) target = $region17
    $region16: #{tpu_custom_call.1} parent=1 // pred_region
      _
    $region17: #{tpu_custom_call.1} parent=1 // pred_fallthru
      _
    // Predicated region
    $region18: #{tpu_custom_call.1} parent=1 // pred_check
      _
    $region19: #{tpu_custom_call.1} parent=1 // pred_check_branch
      %58 = sbr.rel (0) target = $region21
    $region20: #{tpu_custom_call.1} parent=1 // pred_region
      %s60 = ssub.s32 4096, 4096
      %61 = vsyncadd [#allocation9], %s60
      %s62 = sshll.u32 [#allocation8], 4
      %s63 = int_to_ptr.vmem [resolvable:$true] %s62
      %68 = dma.hbm_to_vmem [thread:$0]  %s4, 4096, %s63, [#allocation9], 128, 128, 8
    $region21: #{tpu_custom_call.1} parent=1 // pred_fallthru
      _
    // Predicated region
    $region22: #{tpu_custom_call.1} parent=1 // pred_check
      _
    $region23: #{tpu_custom_call.1} parent=1 // pred_check_branch
      %70 = sbr.rel (0) target = $region25
    $region24: #{tpu_custom_call.1} parent=1 // pred_region
      _
    $region25: #{tpu_custom_call.1} parent=1 // pred_fallthru
      _
    // Predicated region
    $region26: #{tpu_custom_call.1} parent=1 // pred_check
      _
    $region27: #{tpu_custom_call.1} parent=1 // pred_check_branch
      %72 = sbr.rel (0) target = $region29
    $region28: #{tpu_custom_call.1} parent=1 // pred_region
      %s74 = ssub.s32 4096, 4096
      %75 = vsyncadd [#allocation9], %s74
      %s76 = sshll.u32 [#allocation10], 4
      %s77 = int_to_ptr.vmem [resolvable:$true] %s76
      %82 = dma.hbm_to_vmem [thread:$0]  %s6, 4096, %s77, [#allocation9], 128, 128, 8
    $region29: #{tpu_custom_call.1} parent=1 // pred_fallthru
      _
    // Predicated region
    $region30: #{tpu_custom_call.1} parent=1 // pred_check
      _
    $region31: #{tpu_custom_call.1} parent=1 // pred_check_branch
      %84 = sbr.rel (0) target = $region33
    $region32: #{tpu_custom_call.1} parent=1 // pred_region
      _
    $region33: #{tpu_custom_call.1} parent=1 // pred_fallthru
      _
    // Predicated region
    $region34: #{tpu_custom_call.1} parent=1 // pred_check
      _
    $region35: #{tpu_custom_call.1} parent=1 // pred_check_branch
      %86 = sbr.rel (0) target = $region37
    $region36: #{tpu_custom_call.1} parent=1 // pred_region
      %s88 = ssub.s32 2048, 2048
      %89 = vsyncadd [#allocation12], %s88
      %s90 = sshll.u32 [#allocation11], 4
      %s91 = int_to_ptr.vmem [resolvable:$true] %s90
      %96 = dma.hbm_to_vmem [thread:$0]  %s8, 2048, %s91, [#allocation12], 64, 64, 4
    $region37: #{tpu_custom_call.1} parent=1 // pred_fallthru
      _
    // Predicated region
    $region38: #{tpu_custom_call.1} parent=1 // pred_check
      _
    $region39: #{tpu_custom_call.1} parent=1 // pred_check_branch
      %98 = sbr.rel (0) target = $region41
    $region40: #{tpu_custom_call.1} parent=1 // pred_region
      %s100 = ssub.s32 2048, 2048
      %101 = vsyncadd [#allocation12], %s100
      %s102 = sshll.u32 [#allocation13], 4
      %s103 = int_to_ptr.vmem [resolvable:$true] %s102
      %108 = dma.hbm_to_vmem [thread:$0]  %s9, 2048, %s103, [#allocation12], 64, 64, 4
    $region41: #{tpu_custom_call.1} parent=1 // pred_fallthru
      _
    // Predicated region
    $region42: #{tpu_custom_call.1} parent=1 // pred_check
      _
    $region43: #{tpu_custom_call.1} parent=1 // pred_check_branch
      %110 = sbr.rel (0) target = $region45
    $region44: #{tpu_custom_call.1} parent=1 // pred_region
      _
    $region45: #{tpu_custom_call.1} parent=1 // pred_fallthru
      _
    // Predicated region
    $region46: #{tpu_custom_call.1} parent=1 // pred_check
      _
    $region47: #{tpu_custom_call.1} parent=1 // pred_check_branch
      %112 = sbr.rel (0) target = $region49
    $region48: #{tpu_custom_call.1} parent=1 // pred_region
      %113 = dma.done [#allocation3], 64
    $region49: #{tpu_custom_call.1} parent=1 // pred_fallthru
      _
    // Predicated region
    $region50: #{tpu_custom_call.1} parent=1 // pred_check
      _
    $region51: #{tpu_custom_call.1} parent=1 // pred_check_branch
      %115 = sbr.rel (0) target = $region53
    $region52: #{tpu_custom_call.1} parent=1 // pred_region
      %116 = dma.done [#allocation6], 1024
    $region53: #{tpu_custom_call.1} parent=1 // pred_fallthru
      _
    // Predicated region
    $region54: #{tpu_custom_call.1} parent=1 // pred_check
      _
    $region55: #{tpu_custom_call.1} parent=1 // pred_check_branch
      %118 = sbr.rel (0) target = $region57
    $region56: #{tpu_custom_call.1} parent=1 // pred_region
      %119 = dma.done [#allocation6], 4096
    $region57: #{tpu_custom_call.1} parent=1 // pred_fallthru
      _
    // Predicated region
    $region58: #{tpu_custom_call.1} parent=1 // pred_check
      _
    $region59: #{tpu_custom_call.1} parent=1 // pred_check_branch
      %121 = sbr.rel (0) target = $region61
    $region60: #{tpu_custom_call.1} parent=1 // pred_region
      %122 = dma.done [#allocation9], 4096
    $region61: #{tpu_custom_call.1} parent=1 // pred_fallthru
      _
    // Predicated region
    $region62: #{tpu_custom_call.1} parent=1 // pred_check
      _
    $region63: #{tpu_custom_call.1} parent=1 // pred_check_branch
      %124 = sbr.rel (0) target = $region65
    $region64: #{tpu_custom_call.1} parent=1 // pred_region
      %125 = dma.done [#allocation9], 4096
    $region65: #{tpu_custom_call.1} parent=1 // pred_fallthru
      _
    // Predicated region
    $region66: #{tpu_custom_call.1} parent=1 // pred_check
      _
    $region67: #{tpu_custom_call.1} parent=1 // pred_check_branch
      %127 = sbr.rel (0) target = $region69
    $region68: #{tpu_custom_call.1} parent=1 // pred_region
      %128 = dma.done [#allocation12], 2048
    $region69: #{tpu_custom_call.1} parent=1 // pred_fallthru
      _
    // Predicated region
    $region70: #{tpu_custom_call.1} parent=1 // pred_check
      _
    $region71: #{tpu_custom_call.1} parent=1 // pred_check_branch
      %130 = sbr.rel (0) target = $region73
    $region72: #{tpu_custom_call.1} parent=1 // pred_region
      %131 = dma.done [#allocation12], 2048
    $region73: #{tpu_custom_call.1} parent=1 // pred_fallthru
      _
    %v133 = vld [vmem:[#allocation2] sm:$0xf]
    %v134 = vld [vmem:[#allocation5] sm:$0xff]
    %v135 = vld [vmem:[#allocation5 + $0x8] sm:$0xff]
    %v136 = vld [vmem:[#allocation5 + $0x10] sm:$0xff]
    %v137 = vld [vmem:[#allocation5 + $0x18] sm:$0xff]
    %v138 = vld [vmem:[#allocation5 + $0x20] sm:$0xff]
    %v139 = vld [vmem:[#allocation5 + $0x28] sm:$0xff]
    %v140 = vld [vmem:[#allocation5 + $0x30] sm:$0xff]
    %v141 = vld [vmem:[#allocation5 + $0x38] sm:$0xff]
    %v150 = vunpack.c.l.b16 %v134
    %v151 = vunpack.c.h.b16 %v134
    %v152 = vunpack.c.l.b16 %v135
    %v153 = vunpack.c.h.b16 %v135
    %v154 = vunpack.c.l.b16 %v136
    %v155 = vunpack.c.h.b16 %v136
    %v156 = vunpack.c.l.b16 %v137
    %v157 = vunpack.c.h.b16 %v137
    %v158 = vunpack.c.l.b16 %v138
    %v159 = vunpack.c.h.b16 %v138
    %v160 = vunpack.c.l.b16 %v139
    %v161 = vunpack.c.h.b16 %v139
    %v162 = vunpack.c.l.b16 %v140
    %v163 = vunpack.c.h.b16 %v140
    %v164 = vunpack.c.l.b16 %v141
    %v165 = vunpack.c.h.b16 %v141
    %v166 = vpack.c.b16 %v154, %v150
    %v167 = vpack.c.b16 %v155, %v151
    %v168 = vpack.c.b16 %v156, %v152
    %v169 = vpack.c.b16 %v157, %v153
    %v170 = vpack.c.b16 %v162, %v158
    %v171 = vpack.c.b16 %v163, %v159
    %v172 = vpack.c.b16 %v164, %v160
    %v173 = vpack.c.b16 %v165, %v161
    %vm182 = vcmask 261120
    %v184 = vsel %vm182, %v133, 0
    %186 = vmatprep.subr.bf16.mxu0 %v167
    %187 = vmatpush1.bf16.msra.mxu0 %v166
    %188 = vmatprep.subr.bf16.mxu0 %v171
    %189 = vmatpush1.bf16.msra.mxu0 %v170
    %190 = vmatprep.subr.bf16.mxu0 0
    %191 = vmatpush1.bf16.msra.mxu0 0
    %192 = vmatprep.subr.bf16.mxu0 0
    %193 = vmatpush1.bf16.msra.mxu0 0
    %194 = vmatprep.subr.bf16.mxu0 0
    %195 = vmatpush1.bf16.msra.mxu0 0
    %196 = vmatprep.subr.bf16.mxu0 0
    %197 = vmatpush1.bf16.msra.mxu0 0
    %198 = vmatprep.subr.bf16.mxu0 0
    %199 = vmatpush1.bf16.msra.mxu0 0
    %200 = vmatprep.subr.bf16.mxu0 0
    %201 = vmatpush1.bf16.msra.mxu0 0
    %202 = vmatprep.subr.bf16.mxu0 0
    %203 = vmatpush1.bf16.msra.mxu0 0
    %204 = vmatprep.subr.bf16.mxu0 0
    %205 = vmatpush1.bf16.msra.mxu0 0
    %206 = vmatprep.subr.bf16.mxu0 0
    %207 = vmatpush1.bf16.msra.mxu0 0
    %208 = vmatprep.subr.bf16.mxu0 0
    %209 = vmatpush1.bf16.msra.mxu0 0
    %210 = vmatprep.subr.bf16.mxu0 0
    %211 = vmatpush1.bf16.msra.mxu0 0
    %212 = vmatprep.subr.bf16.mxu0 0
    %213 = vmatpush1.bf16.msra.mxu0 0
    %214 = vmatprep.subr.bf16.mxu0 0
    %215 = vmatpush1.bf16.msra.mxu0 0
    %216 = vmatprep.subr.bf16.mxu0 0
    %217 = vmatpush1.bf16.msra.mxu0 0
    %218 = vmatprep.mubr.bf16.mxu0 0
    %219 = vmatmul.mubr.bf16.gmra.mrb[0].mxu0 %v184
    %v220 = vpop.f32.mrb[0].mxu0
    %v221 = vadd.f32 0.0, %v220
    %v222 = vpop.f32.mrb[0].mxu0
    %v223 = vadd.f32 0.0, %v222
    %v224 = vpop.f32.mrb[0].mxu0
    %v225 = vpop.f32.mrb[0].mxu0
    %226 = vdwg.mxu0
    %227 = vmatprep.subr.bf16.mxu0 %v169
    %228 = vmatpush1.bf16.msra.mxu0 %v168
    %229 = vmatprep.subr.bf16.mxu0 %v173
    %230 = vmatpush1.bf16.msra.mxu0 %v172
    %231 = vmatprep.subr.bf16.mxu0 0
    %232 = vmatpush1.bf16.msra.mxu0 0
    %233 = vmatprep.subr.bf16.mxu0 0
    %234 = vmatpush1.bf16.msra.mxu0 0
    %235 = vmatprep.subr.bf16.mxu0 0
    %236 = vmatpush1.bf16.msra.mxu0 0
    %237 = vmatprep.subr.bf16.mxu0 0
    %238 = vmatpush1.bf16.msra.mxu0 0
    %239 = vmatprep.subr.bf16.mxu0 0
    %240 = vmatpush1.bf16.msra.mxu0 0
    %241 = vmatprep.subr.bf16.mxu0 0
    %242 = vmatpush1.bf16.msra.mxu0 0
    %243 = vmatprep.subr.bf16.mxu0 0
    %244 = vmatpush1.bf16.msra.mxu0 0
    %245 = vmatprep.subr.bf16.mxu0 0
    %246 = vmatpush1.bf16.msra.mxu0 0
    %247 = vmatprep.subr.bf16.mxu0 0
    %248 = vmatpush1.bf16.msra.mxu0 0
    %249 = vmatprep.subr.bf16.mxu0 0
    %250 = vmatpush1.bf16.msra.mxu0 0
    %251 = vmatprep.subr.bf16.mxu0 0
    %252 = vmatpush1.bf16.msra.mxu0 0
    %253 = vmatprep.subr.bf16.mxu0 0
    %254 = vmatpush1.bf16.msra.mxu0 0
    %255 = vmatprep.subr.bf16.mxu0 0
    %256 = vmatpush1.bf16.msra.mxu0 0
    %257 = vmatprep.subr.bf16.mxu0 0
    %258 = vmatpush1.bf16.msra.mxu0 0
    %259 = vmatprep.mubr.bf16.mxu0 0
    %260 = vmatmul.mubr.bf16.gmra.mrb[0].mxu0 %v184
    %v261 = vpop.f32.mrb[0].mxu0
    %v262 = vadd.f32 0.0, %v261
    %v263 = vpop.f32.mrb[0].mxu0
    %v264 = vadd.f32 0.0, %v263
    %v265 = vpop.f32.mrb[0].mxu0
    %v266 = vpop.f32.mrb[0].mxu0
    %267 = vdwg.mxu0
    %v268 = vmul.f32 %v221, %v221
    %v269 = vmul.f32 %v223, %v223
    %v270 = vmul.f32 %v268, %v221
    %v271 = vmul.f32 %v269, %v223
    %v272 = vmul.f32 %v270, 0.044715
    %v273 = vmul.f32 %v271, 0.044715
    %v274 = vadd.f32 %v221, %v272
    %v275 = vadd.f32 %v223, %v273
    %v276 = vmul.f32 %v274, 0.7978846
    %v277 = vmul.f32 %v275, 0.7978846
    %v278 = vmul.f32 %v221, 0.5
    %v279 = vmul.f32 %v223, 0.5
    %v280 = vtanh.pop %v276
    %v281 = vtanh.pop %v277
    %v282 = vadd.f32 %v280, 1.0
    %v283 = vadd.f32 %v281, 1.0
    %v284 = vmul.f32 %v278, %v282
    %v285 = vmul.f32 %v279, %v283
    %v286 = vpack.c.bf16 %v284, %v284
    %v287 = vpack.c.bf16 %v285, %v285
    %v288 = vmax.f32 %v262, 0.0
    %v289 = vmax.f32 %v264, 0.0
    %v290 = vpack.c.bf16 %v288, %v288
    %v291 = vpack.c.bf16 %v289, %v289
    %v292 = vld [vmem:[#allocation7] sm:$0xff]
    %v293 = vld [vmem:[#allocation7 + $0x8] sm:$0xff]
    %v294 = vld [vmem:[#allocation7 + $0x10] sm:$0xff]
    %v295 = vld [vmem:[#allocation7 + $0x18] sm:$0xff]
    %v296 = vld [vmem:[#allocation7 + $0x20] sm:$0xff]
    %v297 = vld [vmem:[#allocation7 + $0x28] sm:$0xff]
    %v298 = vld [vmem:[#allocation7 + $0x30] sm:$0xff]
    %v299 = vld [vmem:[#allocation7 + $0x38] sm:$0xff]
    %v300 = vld [vmem:[#allocation7 + $0x40] sm:$0xff]
    %v301 = vld [vmem:[#allocation7 + $0x48] sm:$0xff]
    %v302 = vld [vmem:[#allocation7 + $0x50] sm:$0xff]
    %v303 = vld [vmem:[#allocation7 + $0x58] sm:$0xff]
    %v304 = vld [vmem:[#allocation7 + $0x60] sm:$0xff]
    %v305 = vld [vmem:[#allocation7 + $0x68] sm:$0xff]
    %v306 = vld [vmem:[#allocation7 + $0x70] sm:$0xff]
    %v307 = vld [vmem:[#allocation7 + $0x78] sm:$0xff]
    %v308 = vld [vmem:[#allocation7 + $0x80] sm:$0xff]
    %v309 = vld [vmem:[#allocation7 + $0x88] sm:$0xff]
    %v310 = vld [vmem:[#allocation7 + $0x90] sm:$0xff]
    %v311 = vld [vmem:[#allocation7 + $0x98] sm:$0xff]
    %v312 = vld [vmem:[#allocation7 + $0xa0] sm:$0xff]
    %v313 = vld [vmem:[#allocation7 + $0xa8] sm:$0xff]
    %v314 = vld [vmem:[#allocation7 + $0xb0] sm:$0xff]
    %v315 = vld [vmem:[#allocation7 + $0xb8] sm:$0xff]
    %v316 = vld [vmem:[#allocation7 + $0xc0] sm:$0xff]
    %v317 = vld [vmem:[#allocation7 + $0xc8] sm:$0xff]
    %v318 = vld [vmem:[#allocation7 + $0xd0] sm:$0xff]
    %v319 = vld [vmem:[#allocation7 + $0xd8] sm:$0xff]
    %v320 = vld [vmem:[#allocation7 + $0xe0] sm:$0xff]
    %v321 = vld [vmem:[#allocation7 + $0xe8] sm:$0xff]
    %v322 = vld [vmem:[#allocation7 + $0xf0] sm:$0xff]
    %v323 = vld [vmem:[#allocation7 + $0xf8] sm:$0xff]
    %v324 = vld [vmem:[%s3] sm:$0x3]
    %v326 = vlaneseq
    %v327 = vshrl.u32 %v326, 7
    %v328 = vsub.s32 0, %v327
    %v329 = vrot.slane %v324, %v328
    %v330 = vlaneseq
    %v331 = vshrl.u32 %v330, 7
    %v332 = vsub.s32 1, %v331
    %v333 = vrot.slane %v324, %v332
    %v368 = vunpack.c.l.b16 %v292
    %v369 = vunpack.c.h.b16 %v292
    %v370 = vunpack.c.l.b16 %v293
    %v371 = vunpack.c.h.b16 %v293
    %v372 = vunpack.c.l.b16 %v294
    %v373 = vunpack.c.h.b16 %v294
    %v374 = vunpack.c.l.b16 %v295
    %v375 = vunpack.c.h.b16 %v295
    %v376 = vunpack.c.l.b16 %v296
    %v377 = vunpack.c.h.b16 %v296
    %v378 = vunpack.c.l.b16 %v297
    %v379 = vunpack.c.h.b16 %v297
    %v380 = vunpack.c.l.b16 %v298
    %v381 = vunpack.c.h.b16 %v298
    %v382 = vunpack.c.l.b16 %v299
    %v383 = vunpack.c.h.b16 %v299
    %v384 = vunpack.c.l.b16 %v300
    %v385 = vunpack.c.h.b16 %v300
    %v386 = vunpack.c.l.b16 %v301
    %v387 = vunpack.c.h.b16 %v301
    %v388 = vunpack.c.l.b16 %v302
    %v389 = vunpack.c.h.b16 %v302
    %v390 = vunpack.c.l.b16 %v303
    %v391 = vunpack.c.h.b16 %v303
    %v392 = vunpack.c.l.b16 %v304
    %v393 = vunpack.c.h.b16 %v304
    %v394 = vunpack.c.l.b16 %v305
    %v395 = vunpack.c.h.b16 %v305
    %v396 = vunpack.c.l.b16 %v306
    %v397 = vunpack.c.h.b16 %v306
    %v398 = vunpack.c.l.b16 %v307
    %v399 = vunpack.c.h.b16 %v307
    %v400 = vunpack.c.l.b16 %v308
    %v401 = vunpack.c.h.b16 %v308
    %v402 = vunpack.c.l.b16 %v309
    %v403 = vunpack.c.h.b16 %v309
    %v404 = vunpack.c.l.b16 %v310
    %v405 = vunpack.c.h.b16 %v310
    %v406 = vunpack.c.l.b16 %v311
    %v407 = vunpack.c.h.b16 %v311
    %v408 = vunpack.c.l.b16 %v312
    %v409 = vunpack.c.h.b16 %v312
    %v410 = vunpack.c.l.b16 %v313
    %v411 = vunpack.c.h.b16 %v313
    %v412 = vunpack.c.l.b16 %v314
    %v413 = vunpack.c.h.b16 %v314
    %v414 = vunpack.c.l.b16 %v315
    %v415 = vunpack.c.h.b16 %v315
    %v416 = vunpack.c.l.b16 %v316
    %v417 = vunpack.c.h.b16 %v316
    %v418 = vunpack.c.l.b16 %v317
    %v419 = vunpack.c.h.b16 %v317
    %v420 = vunpack.c.l.b16 %v318
    %v421 = vunpack.c.h.b16 %v318
    %v422 = vunpack.c.l.b16 %v319
    %v423 = vunpack.c.h.b16 %v319
    %v424 = vunpack.c.l.b16 %v320
    %v425 = vunpack.c.h.b16 %v320
    %v426 = vunpack.c.l.b16 %v321
    %v427 = vunpack.c.h.b16 %v321
    %v428 = vunpack.c.l.b16 %v322
    %v429 = vunpack.c.h.b16 %v322
    %v430 = vunpack.c.l.b16 %v323
    %v431 = vunpack.c.h.b16 %v323
    %v432 = vpack.c.b16 %v370, %v368
    %v433 = vpack.c.b16 %v371, %v369
    %v434 = vpack.c.b16 %v374, %v372
    %v435 = vpack.c.b16 %v375, %v373
    %v436 = vpack.c.b16 %v378, %v376
    %v437 = vpack.c.b16 %v379, %v377
    %v438 = vpack.c.b16 %v382, %v380
    %v439 = vpack.c.b16 %v383, %v381
    %v440 = vpack.c.b16 %v386, %v384
    %v441 = vpack.c.b16 %v387, %v385
    %v442 = vpack.c.b16 %v390, %v388
    %v443 = vpack.c.b16 %v391, %v389
    %v444 = vpack.c.b16 %v394, %v392
    %v445 = vpack.c.b16 %v395, %v393
    %v446 = vpack.c.b16 %v398, %v396
    %v447 = vpack.c.b16 %v399, %v397
    %v448 = vpack.c.b16 %v402, %v400
    %v449 = vpack.c.b16 %v403, %v401
    %v450 = vpack.c.b16 %v406, %v404
    %v451 = vpack.c.b16 %v407, %v405
    %v452 = vpack.c.b16 %v410, %v408
    %v453 = vpack.c.b16 %v411, %v409
    %v454 = vpack.c.b16 %v414, %v412
    %v455 = vpack.c.b16 %v415, %v413
    %v456 = vpack.c.b16 %v418, %v416
    %v457 = vpack.c.b16 %v419, %v417
    %v458 = vpack.c.b16 %v422, %v420
    %v459 = vpack.c.b16 %v423, %v421
    %v460 = vpack.c.b16 %v426, %v424
    %v461 = vpack.c.b16 %v427, %v425
    %v462 = vpack.c.b16 %v430, %v428
    %v463 = vpack.c.b16 %v431, %v429
    %496 = vmatprep.subr.bf16.mxu0 %v433
    %497 = vmatpush1.bf16.msra.mxu0 %v432
    %498 = vmatprep.subr.bf16.mxu0 %v435
    %499 = vmatpush1.bf16.msra.mxu0 %v434
    %500 = vmatprep.subr.bf16.mxu0 %v437
    %501 = vmatpush1.bf16.msra.mxu0 %v436
    %502 = vmatprep.subr.bf16.mxu0 %v439
    %503 = vmatpush1.bf16.msra.mxu0 %v438
    %504 = vmatprep.subr.bf16.mxu0 %v441
    %505 = vmatpush1.bf16.msra.mxu0 %v440
    %506 = vmatprep.subr.bf16.mxu0 %v443
    %507 = vmatpush1.bf16.msra.mxu0 %v442
    %508 = vmatprep.subr.bf16.mxu0 %v445
    %509 = vmatpush1.bf16.msra.mxu0 %v444
    %510 = vmatprep.subr.bf16.mxu0 %v447
    %511 = vmatpush1.bf16.msra.mxu0 %v446
    %512 = vmatprep.subr.bf16.mxu0 %v449
    %513 = vmatpush1.bf16.msra.mxu0 %v448
    %514 = vmatprep.subr.bf16.mxu0 %v451
    %515 = vmatpush1.bf16.msra.mxu0 %v450
    %516 = vmatprep.subr.bf16.mxu0 %v453
    %517 = vmatpush1.bf16.msra.mxu0 %v452
    %518 = vmatprep.subr.bf16.mxu0 %v455
    %519 = vmatpush1.bf16.msra.mxu0 %v454
    %520 = vmatprep.subr.bf16.mxu0 %v457
    %521 = vmatpush1.bf16.msra.mxu0 %v456
    %522 = vmatprep.subr.bf16.mxu0 %v459
    %523 = vmatpush1.bf16.msra.mxu0 %v458
    %524 = vmatprep.subr.bf16.mxu0 %v461
    %525 = vmatpush1.bf16.msra.mxu0 %v460
    %526 = vmatprep.subr.bf16.mxu0 %v463
    %527 = vmatpush1.bf16.msra.mxu0 %v462
    %528 = vmatprep.mubr.bf16.mxu0 %v287
    %529 = vmatmul.mubr.bf16.gmra.mrb[0].mxu0 %v286
    %v530 = vpop.f32.mrb[0].mxu0
    %v531 = vadd.f32 %v329, %v530
    %v532 = vpop.f32.mrb[0].mxu0
    %v533 = vadd.f32 %v333, %v532
    %v534 = vpop.f32.mrb[0].mxu0
    %v535 = vpop.f32.mrb[0].mxu0
    %536 = vdwg.mxu0
    %v537 = vmul.f32 %v531, %v531
    %v538 = vmul.f32 %v533, %v533
    %v539 = vmul.f32 %v537, %v531
    %v540 = vmul.f32 %v538, %v533
    %v541 = vmul.f32 %v539, 0.044715
    %v542 = vmul.f32 %v540, 0.044715
    %v543 = vadd.f32 %v531, %v541
    %v544 = vadd.f32 %v533, %v542
    %v545 = vmul.f32 %v543, 0.7978846
    %v546 = vmul.f32 %v544, 0.7978846
    %v547 = vmul.f32 %v531, 0.5
    %v548 = vmul.f32 %v533, 0.5
    %v549 = vtanh.pop %v545
    %v550 = vtanh.pop %v546
    %v551 = vadd.f32 %v549, 1.0
    %v552 = vadd.f32 %v550, 1.0
    %v553 = vmul.f32 %v547, %v551
    %v554 = vmul.f32 %v548, %v552
    %v555 = vpack.c.bf16 %v553, %v553
    %v556 = vpack.c.bf16 %v554, %v554
    %v557 = vld [vmem:[#allocation8] sm:$0xff]
    %v558 = vld [vmem:[#allocation8 + $0x8] sm:$0xff]
    %v559 = vld [vmem:[#allocation8 + $0x10] sm:$0xff]
    %v560 = vld [vmem:[#allocation8 + $0x18] sm:$0xff]
    %v561 = vld [vmem:[#allocation8 + $0x20] sm:$0xff]
    %v562 = vld [vmem:[#allocation8 + $0x28] sm:$0xff]
    %v563 = vld [vmem:[#allocation8 + $0x30] sm:$0xff]
    %v564 = vld [vmem:[#allocation8 + $0x38] sm:$0xff]
    %v565 = vld [vmem:[#allocation8 + $0x40] sm:$0xff]
    %v566 = vld [vmem:[#allocation8 + $0x48] sm:$0xff]
    %v567 = vld [vmem:[#allocation8 + $0x50] sm:$0xff]
    %v568 = vld [vmem:[#allocation8 + $0x58] sm:$0xff]
    %v569 = vld [vmem:[#allocation8 + $0x60] sm:$0xff]
    %v570 = vld [vmem:[#allocation8 + $0x68] sm:$0xff]
    %v571 = vld [vmem:[#allocation8 + $0x70] sm:$0xff]
    %v572 = vld [vmem:[#allocation8 + $0x78] sm:$0xff]
    %v573 = vld [vmem:[#allocation8 + $0x80] sm:$0xff]
    %v574 = vld [vmem:[#allocation8 + $0x88] sm:$0xff]
    %v575 = vld [vmem:[#allocation8 + $0x90] sm:$0xff]
    %v576 = vld [vmem:[#allocation8 + $0x98] sm:$0xff]
    %v577 = vld [vmem:[#allocation8 + $0xa0] sm:$0xff]
    %v578 = vld [vmem:[#allocation8 + $0xa8] sm:$0xff]
    %v579 = vld [vmem:[#allocation8 + $0xb0] sm:$0xff]
    %v580 = vld [vmem:[#allocation8 + $0xb8] sm:$0xff]
    %v581 = vld [vmem:[#allocation8 + $0xc0] sm:$0xff]
    %v582 = vld [vmem:[#allocation8 + $0xc8] sm:$0xff]
    %v583 = vld [vmem:[#allocation8 + $0xd0] sm:$0xff]
    %v584 = vld [vmem:[#allocation8 + $0xd8] sm:$0xff]
    %v585 = vld [vmem:[#allocation8 + $0xe0] sm:$0xff]
    %v586 = vld [vmem:[#allocation8 + $0xe8] sm:$0xff]
    %v587 = vld [vmem:[#allocation8 + $0xf0] sm:$0xff]
    %v588 = vld [vmem:[#allocation8 + $0xf8] sm:$0xff]
    %v589 = vld [vmem:[%s5] sm:$0x3]
    %v591 = vlaneseq
    %v592 = vshrl.u32 %v591, 7
    %v593 = vsub.s32 0, %v592
    %v594 = vrot.slane %v589, %v593
    %v595 = vlaneseq
    %v596 = vshrl.u32 %v595, 7
    %v597 = vsub.s32 1, %v596
    %v598 = vrot.slane %v589, %v597
    %v633 = vunpack.c.l.b16 %v557
    %v634 = vunpack.c.h.b16 %v557
    %v635 = vunpack.c.l.b16 %v558
    %v636 = vunpack.c.h.b16 %v558
    %v637 = vunpack.c.l.b16 %v559
    %v638 = vunpack.c.h.b16 %v559
    %v639 = vunpack.c.l.b16 %v560
    %v640 = vunpack.c.h.b16 %v560
    %v641 = vunpack.c.l.b16 %v561
    %v642 = vunpack.c.h.b16 %v561
    %v643 = vunpack.c.l.b16 %v562
    %v644 = vunpack.c.h.b16 %v562
    %v645 = vunpack.c.l.b16 %v563
    %v646 = vunpack.c.h.b16 %v563
    %v647 = vunpack.c.l.b16 %v564
    %v648 = vunpack.c.h.b16 %v564
    %v649 = vunpack.c.l.b16 %v565
    %v650 = vunpack.c.h.b16 %v565
    %v651 = vunpack.c.l.b16 %v566
    %v652 = vunpack.c.h.b16 %v566
    %v653 = vunpack.c.l.b16 %v567
    %v654 = vunpack.c.h.b16 %v567
    %v655 = vunpack.c.l.b16 %v568
    %v656 = vunpack.c.h.b16 %v568
    %v657 = vunpack.c.l.b16 %v569
    %v658 = vunpack.c.h.b16 %v569
    %v659 = vunpack.c.l.b16 %v570
    %v660 = vunpack.c.h.b16 %v570
    %v661 = vunpack.c.l.b16 %v571
    %v662 = vunpack.c.h.b16 %v571
    %v663 = vunpack.c.l.b16 %v572
    %v664 = vunpack.c.h.b16 %v572
    %v665 = vunpack.c.l.b16 %v573
    %v666 = vunpack.c.h.b16 %v573
    %v667 = vunpack.c.l.b16 %v574
    %v668 = vunpack.c.h.b16 %v574
    %v669 = vunpack.c.l.b16 %v575
    %v670 = vunpack.c.h.b16 %v575
    %v671 = vunpack.c.l.b16 %v576
    %v672 = vunpack.c.h.b16 %v576
    %v673 = vunpack.c.l.b16 %v577
    %v674 = vunpack.c.h.b16 %v577
    %v675 = vunpack.c.l.b16 %v578
    %v676 = vunpack.c.h.b16 %v578
    %v677 = vunpack.c.l.b16 %v579
    %v678 = vunpack.c.h.b16 %v579
    %v679 = vunpack.c.l.b16 %v580
    %v680 = vunpack.c.h.b16 %v580
    %v681 = vunpack.c.l.b16 %v581
    %v682 = vunpack.c.h.b16 %v581
    %v683 = vunpack.c.l.b16 %v582
    %v684 = vunpack.c.h.b16 %v582
    %v685 = vunpack.c.l.b16 %v583
    %v686 = vunpack.c.h.b16 %v583
    %v687 = vunpack.c.l.b16 %v584
    %v688 = vunpack.c.h.b16 %v584
    %v689 = vunpack.c.l.b16 %v585
    %v690 = vunpack.c.h.b16 %v585
    %v691 = vunpack.c.l.b16 %v586
    %v692 = vunpack.c.h.b16 %v586
    %v693 = vunpack.c.l.b16 %v587
    %v694 = vunpack.c.h.b16 %v587
    %v695 = vunpack.c.l.b16 %v588
    %v696 = vunpack.c.h.b16 %v588
    %v697 = vpack.c.b16 %v635, %v633
    %v698 = vpack.c.b16 %v636, %v634
    %v699 = vpack.c.b16 %v639, %v637
    %v700 = vpack.c.b16 %v640, %v638
    %v701 = vpack.c.b16 %v643, %v641
    %v702 = vpack.c.b16 %v644, %v642
    %v703 = vpack.c.b16 %v647, %v645
    %v704 = vpack.c.b16 %v648, %v646
    %v705 = vpack.c.b16 %v651, %v649
    %v706 = vpack.c.b16 %v652, %v650
    %v707 = vpack.c.b16 %v655, %v653
    %v708 = vpack.c.b16 %v656, %v654
    %v709 = vpack.c.b16 %v659, %v657
    %v710 = vpack.c.b16 %v660, %v658
    %v711 = vpack.c.b16 %v663, %v661
    %v712 = vpack.c.b16 %v664, %v662
    %v713 = vpack.c.b16 %v667, %v665
    %v714 = vpack.c.b16 %v668, %v666
    %v715 = vpack.c.b16 %v671, %v669
    %v716 = vpack.c.b16 %v672, %v670
    %v717 = vpack.c.b16 %v675, %v673
    %v718 = vpack.c.b16 %v676, %v674
    %v719 = vpack.c.b16 %v679, %v677
    %v720 = vpack.c.b16 %v680, %v678
    %v721 = vpack.c.b16 %v683, %v681
    %v722 = vpack.c.b16 %v684, %v682
    %v723 = vpack.c.b16 %v687, %v685
    %v724 = vpack.c.b16 %v688, %v686
    %v725 = vpack.c.b16 %v691, %v689
    %v726 = vpack.c.b16 %v692, %v690
    %v727 = vpack.c.b16 %v695, %v693
    %v728 = vpack.c.b16 %v696, %v694
    %761 = vmatprep.subr.bf16.mxu0 %v698
    %762 = vmatpush1.bf16.msra.mxu0 %v697
    %763 = vmatprep.subr.bf16.mxu0 %v700
    %764 = vmatpush1.bf16.msra.mxu0 %v699
    %765 = vmatprep.subr.bf16.mxu0 %v702
    %766 = vmatpush1.bf16.msra.mxu0 %v701
    %767 = vmatprep.subr.bf16.mxu0 %v704
    %768 = vmatpush1.bf16.msra.mxu0 %v703
    %769 = vmatprep.subr.bf16.mxu0 %v706
    %770 = vmatpush1.bf16.msra.mxu0 %v705
    %771 = vmatprep.subr.bf16.mxu0 %v708
    %772 = vmatpush1.bf16.msra.mxu0 %v707
    %773 = vmatprep.subr.bf16.mxu0 %v710
    %774 = vmatpush1.bf16.msra.mxu0 %v709
    %775 = vmatprep.subr.bf16.mxu0 %v712
    %776 = vmatpush1.bf16.msra.mxu0 %v711
    %777 = vmatprep.subr.bf16.mxu0 %v714
    %778 = vmatpush1.bf16.msra.mxu0 %v713
    %779 = vmatprep.subr.bf16.mxu0 %v716
    %780 = vmatpush1.bf16.msra.mxu0 %v715
    %781 = vmatprep.subr.bf16.mxu0 %v718
    %782 = vmatpush1.bf16.msra.mxu0 %v717
    %783 = vmatprep.subr.bf16.mxu0 %v720
    %784 = vmatpush1.bf16.msra.mxu0 %v719
    %785 = vmatprep.subr.bf16.mxu0 %v722
    %786 = vmatpush1.bf16.msra.mxu0 %v721
    %787 = vmatprep.subr.bf16.mxu0 %v724
    %788 = vmatpush1.bf16.msra.mxu0 %v723
    %789 = vmatprep.subr.bf16.mxu0 %v726
    %790 = vmatpush1.bf16.msra.mxu0 %v725
    %791 = vmatprep.subr.bf16.mxu0 %v728
    %792 = vmatpush1.bf16.msra.mxu0 %v727
    %793 = vmatprep.mubr.bf16.mxu0 %v556
    %794 = vmatmul.mubr.bf16.gmra.mrb[0].mxu0 %v555
    %v795 = vpop.f32.mrb[0].mxu0
    %v796 = vadd.f32 %v594, %v795
    %v797 = vpop.f32.mrb[0].mxu0
    %v798 = vadd.f32 %v598, %v797
    %v799 = vpop.f32.mrb[0].mxu0
    %v800 = vpop.f32.mrb[0].mxu0
    %801 = vdwg.mxu0
    %v802 = vmul.f32 %v796, %v796
    %v803 = vmul.f32 %v798, %v798
    %v804 = vmul.f32 %v802, %v796
    %v805 = vmul.f32 %v803, %v798
    %v806 = vmul.f32 %v804, 0.044715
    %v807 = vmul.f32 %v805, 0.044715
    %v808 = vadd.f32 %v796, %v806
    %v809 = vadd.f32 %v798, %v807
    %v810 = vmul.f32 %v808, 0.7978846
    %v811 = vmul.f32 %v809, 0.7978846
    %v812 = vmul.f32 %v796, 0.5
    %v813 = vmul.f32 %v798, 0.5
    %v814 = vtanh.pop %v810
    %v815 = vtanh.pop %v811
    %v816 = vadd.f32 %v814, 1.0
    %v817 = vadd.f32 %v815, 1.0
    %v818 = vmul.f32 %v812, %v816
    %v819 = vmul.f32 %v813, %v817
    %v820 = vpack.c.bf16 %v818, %v818
    %v821 = vpack.c.bf16 %v819, %v819
    %v822 = vld [vmem:[#allocation10] sm:$0xff]
    %v823 = vld [vmem:[#allocation10 + $0x8] sm:$0xff]
    %v824 = vld [vmem:[#allocation10 + $0x10] sm:$0xff]
    %v825 = vld [vmem:[#allocation10 + $0x18] sm:$0xff]
    %v826 = vld [vmem:[#allocation10 + $0x20] sm:$0xff]
    %v827 = vld [vmem:[#allocation10 + $0x28] sm:$0xff]
    %v828 = vld [vmem:[#allocation10 + $0x30] sm:$0xff]
    %v829 = vld [vmem:[#allocation10 + $0x38] sm:$0xff]
    %v830 = vld [vmem:[#allocation10 + $0x40] sm:$0xff]
    %v831 = vld [vmem:[#allocation10 + $0x48] sm:$0xff]
    %v832 = vld [vmem:[#allocation10 + $0x50] sm:$0xff]
    %v833 = vld [vmem:[#allocation10 + $0x58] sm:$0xff]
    %v834 = vld [vmem:[#allocation10 + $0x60] sm:$0xff]
    %v835 = vld [vmem:[#allocation10 + $0x68] sm:$0xff]
    %v836 = vld [vmem:[#allocation10 + $0x70] sm:$0xff]
    %v837 = vld [vmem:[#allocation10 + $0x78] sm:$0xff]
    %v838 = vld [vmem:[#allocation10 + $0x80] sm:$0xff]
    %v839 = vld [vmem:[#allocation10 + $0x88] sm:$0xff]
    %v840 = vld [vmem:[#allocation10 + $0x90] sm:$0xff]
    %v841 = vld [vmem:[#allocation10 + $0x98] sm:$0xff]
    %v842 = vld [vmem:[#allocation10 + $0xa0] sm:$0xff]
    %v843 = vld [vmem:[#allocation10 + $0xa8] sm:$0xff]
    %v844 = vld [vmem:[#allocation10 + $0xb0] sm:$0xff]
    %v845 = vld [vmem:[#allocation10 + $0xb8] sm:$0xff]
    %v846 = vld [vmem:[#allocation10 + $0xc0] sm:$0xff]
    %v847 = vld [vmem:[#allocation10 + $0xc8] sm:$0xff]
    %v848 = vld [vmem:[#allocation10 + $0xd0] sm:$0xff]
    %v849 = vld [vmem:[#allocation10 + $0xd8] sm:$0xff]
    %v850 = vld [vmem:[#allocation10 + $0xe0] sm:$0xff]
    %v851 = vld [vmem:[#allocation10 + $0xe8] sm:$0xff]
    %v852 = vld [vmem:[#allocation10 + $0xf0] sm:$0xff]
    %v853 = vld [vmem:[#allocation10 + $0xf8] sm:$0xff]
    %v854 = vld [vmem:[%s7] sm:$0x3]
    %v856 = vlaneseq
    %v857 = vshrl.u32 %v856, 7
    %v858 = vsub.s32 0, %v857
    %v859 = vrot.slane %v854, %v858
    %v860 = vlaneseq
    %v861 = vshrl.u32 %v860, 7
    %v862 = vsub.s32 1, %v861
    %v863 = vrot.slane %v854, %v862
    %v898 = vunpack.c.l.b16 %v822
    %v899 = vunpack.c.h.b16 %v822
    %v900 = vunpack.c.l.b16 %v823
    %v901 = vunpack.c.h.b16 %v823
    %v902 = vunpack.c.l.b16 %v824
    %v903 = vunpack.c.h.b16 %v824
    %v904 = vunpack.c.l.b16 %v825
    %v905 = vunpack.c.h.b16 %v825
    %v906 = vunpack.c.l.b16 %v826
    %v907 = vunpack.c.h.b16 %v826
    %v908 = vunpack.c.l.b16 %v827
    %v909 = vunpack.c.h.b16 %v827
    %v910 = vunpack.c.l.b16 %v828
    %v911 = vunpack.c.h.b16 %v828
    %v912 = vunpack.c.l.b16 %v829
    %v913 = vunpack.c.h.b16 %v829
    %v914 = vunpack.c.l.b16 %v830
    %v915 = vunpack.c.h.b16 %v830
    %v916 = vunpack.c.l.b16 %v831
    %v917 = vunpack.c.h.b16 %v831
    %v918 = vunpack.c.l.b16 %v832
    %v919 = vunpack.c.h.b16 %v832
    %v920 = vunpack.c.l.b16 %v833
    %v921 = vunpack.c.h.b16 %v833
    %v922 = vunpack.c.l.b16 %v834
    %v923 = vunpack.c.h.b16 %v834
    %v924 = vunpack.c.l.b16 %v835
    %v925 = vunpack.c.h.b16 %v835
    %v926 = vunpack.c.l.b16 %v836
    %v927 = vunpack.c.h.b16 %v836
    %v928 = vunpack.c.l.b16 %v837
    %v929 = vunpack.c.h.b16 %v837
    %v930 = vunpack.c.l.b16 %v838
    %v931 = vunpack.c.h.b16 %v838
    %v932 = vunpack.c.l.b16 %v839
    %v933 = vunpack.c.h.b16 %v839
    %v934 = vunpack.c.l.b16 %v840
    %v935 = vunpack.c.h.b16 %v840
    %v936 = vunpack.c.l.b16 %v841
    %v937 = vunpack.c.h.b16 %v841
    %v938 = vunpack.c.l.b16 %v842
    %v939 = vunpack.c.h.b16 %v842
    %v940 = vunpack.c.l.b16 %v843
    %v941 = vunpack.c.h.b16 %v843
    %v942 = vunpack.c.l.b16 %v844
    %v943 = vunpack.c.h.b16 %v844
    %v944 = vunpack.c.l.b16 %v845
    %v945 = vunpack.c.h.b16 %v845
    %v946 = vunpack.c.l.b16 %v846
    %v947 = vunpack.c.h.b16 %v846
    %v948 = vunpack.c.l.b16 %v847
    %v949 = vunpack.c.h.b16 %v847
    %v950 = vunpack.c.l.b16 %v848
    %v951 = vunpack.c.h.b16 %v848
    %v952 = vunpack.c.l.b16 %v849
    %v953 = vunpack.c.h.b16 %v849
    %v954 = vunpack.c.l.b16 %v850
    %v955 = vunpack.c.h.b16 %v850
    %v956 = vunpack.c.l.b16 %v851
    %v957 = vunpack.c.h.b16 %v851
    %v958 = vunpack.c.l.b16 %v852
    %v959 = vunpack.c.h.b16 %v852
    %v960 = vunpack.c.l.b16 %v853
    %v961 = vunpack.c.h.b16 %v853
    %v962 = vpack.c.b16 %v900, %v898
    %v963 = vpack.c.b16 %v901, %v899
    %v964 = vpack.c.b16 %v904, %v902
    %v965 = vpack.c.b16 %v905, %v903
    %v966 = vpack.c.b16 %v908, %v906
    %v967 = vpack.c.b16 %v909, %v907
    %v968 = vpack.c.b16 %v912, %v910
    %v969 = vpack.c.b16 %v913, %v911
    %v970 = vpack.c.b16 %v916, %v914
    %v971 = vpack.c.b16 %v917, %v915
    %v972 = vpack.c.b16 %v920, %v918
    %v973 = vpack.c.b16 %v921, %v919
    %v974 = vpack.c.b16 %v924, %v922
    %v975 = vpack.c.b16 %v925, %v923
    %v976 = vpack.c.b16 %v928, %v926
    %v977 = vpack.c.b16 %v929, %v927
    %v978 = vpack.c.b16 %v932, %v930
    %v979 = vpack.c.b16 %v933, %v931
    %v980 = vpack.c.b16 %v936, %v934
    %v981 = vpack.c.b16 %v937, %v935
    %v982 = vpack.c.b16 %v940, %v938
    %v983 = vpack.c.b16 %v941, %v939
    %v984 = vpack.c.b16 %v944, %v942
    %v985 = vpack.c.b16 %v945, %v943
    %v986 = vpack.c.b16 %v948, %v946
    %v987 = vpack.c.b16 %v949, %v947
    %v988 = vpack.c.b16 %v952, %v950
    %v989 = vpack.c.b16 %v953, %v951
    %v990 = vpack.c.b16 %v956, %v954
    %v991 = vpack.c.b16 %v957, %v955
    %v992 = vpack.c.b16 %v960, %v958
    %v993 = vpack.c.b16 %v961, %v959
    %1026 = vmatprep.subr.bf16.mxu0 %v963
    %1027 = vmatpush1.bf16.msra.mxu0 %v962
    %1028 = vmatprep.subr.bf16.mxu0 %v965
    %1029 = vmatpush1.bf16.msra.mxu0 %v964
    %1030 = vmatprep.subr.bf16.mxu0 %v967
    %1031 = vmatpush1.bf16.msra.mxu0 %v966
    %1032 = vmatprep.subr.bf16.mxu0 %v969
    %1033 = vmatpush1.bf16.msra.mxu0 %v968
    %1034 = vmatprep.subr.bf16.mxu0 %v971
    %1035 = vmatpush1.bf16.msra.mxu0 %v970
    %1036 = vmatprep.subr.bf16.mxu0 %v973
    %1037 = vmatpush1.bf16.msra.mxu0 %v972
    %1038 = vmatprep.subr.bf16.mxu0 %v975
    %1039 = vmatpush1.bf16.msra.mxu0 %v974
    %1040 = vmatprep.subr.bf16.mxu0 %v977
    %1041 = vmatpush1.bf16.msra.mxu0 %v976
    %1042 = vmatprep.subr.bf16.mxu0 %v979
    %1043 = vmatpush1.bf16.msra.mxu0 %v978
    %1044 = vmatprep.subr.bf16.mxu0 %v981
    %1045 = vmatpush1.bf16.msra.mxu0 %v980
    %1046 = vmatprep.subr.bf16.mxu0 %v983
    %1047 = vmatpush1.bf16.msra.mxu0 %v982
    %1048 = vmatprep.subr.bf16.mxu0 %v985
    %1049 = vmatpush1.bf16.msra.mxu0 %v984
    %1050 = vmatprep.subr.bf16.mxu0 %v987
    %1051 = vmatpush1.bf16.msra.mxu0 %v986
    %1052 = vmatprep.subr.bf16.mxu0 %v989
    %1053 = vmatpush1.bf16.msra.mxu0 %v988
    %1054 = vmatprep.subr.bf16.mxu0 %v991
    %1055 = vmatpush1.bf16.msra.mxu0 %v990
    %1056 = vmatprep.subr.bf16.mxu0 %v993
    %1057 = vmatpush1.bf16.msra.mxu0 %v992
    %1058 = vmatprep.mubr.bf16.mxu0 %v291
    %1059 = vmatmul.mubr.bf16.gmra.mrb[0].mxu0 %v290
    %v1060 = vpop.f32.mrb[0].mxu0
    %v1061 = vadd.f32 %v859, %v1060
    %v1062 = vpop.f32.mrb[0].mxu0
    %v1063 = vadd.f32 %v863, %v1062
    %v1064 = vpop.f32.mrb[0].mxu0
    %v1065 = vpop.f32.mrb[0].mxu0
    %1066 = vdwg.mxu0
    %v1067 = vmax.f32 %v1061, 0.0
    %v1068 = vmax.f32 %v1063, 0.0
    %v1069 = vpack.c.bf16 %v1067, %v1067
    %v1070 = vpack.c.bf16 %v1068, %v1068
    %v1071 = vld [vmem:[#allocation11] sm:$0xf]
    %v1072 = vld [vmem:[#allocation11 + $0x4] sm:$0xf]
    %v1073 = vld [vmem:[#allocation11 + $0x8] sm:$0xf]
    %v1074 = vld [vmem:[#allocation11 + $0xc] sm:$0xf]
    %v1075 = vld [vmem:[#allocation11 + $0x10] sm:$0xf]
    %v1076 = vld [vmem:[#allocation11 + $0x14] sm:$0xf]
    %v1077 = vld [vmem:[#allocation11 + $0x18] sm:$0xf]
    %v1078 = vld [vmem:[#allocation11 + $0x1c] sm:$0xf]
    %v1079 = vld [vmem:[#allocation11 + $0x20] sm:$0xf]
    %v1080 = vld [vmem:[#allocation11 + $0x24] sm:$0xf]
    %v1081 = vld [vmem:[#allocation11 + $0x28] sm:$0xf]
    %v1082 = vld [vmem:[#allocation11 + $0x2c] sm:$0xf]
    %v1083 = vld [vmem:[#allocation11 + $0x30] sm:$0xf]
    %v1084 = vld [vmem:[#allocation11 + $0x34] sm:$0xf]
    %v1085 = vld [vmem:[#allocation11 + $0x38] sm:$0xf]
    %v1086 = vld [vmem:[#allocation11 + $0x3c] sm:$0xf]
    %v1087 = vld [vmem:[#allocation11 + $0x40] sm:$0xf]
    %v1088 = vld [vmem:[#allocation11 + $0x44] sm:$0xf]
    %v1089 = vld [vmem:[#allocation11 + $0x48] sm:$0xf]
    %v1090 = vld [vmem:[#allocation11 + $0x4c] sm:$0xf]
    %v1091 = vld [vmem:[#allocation11 + $0x50] sm:$0xf]
    %v1092 = vld [vmem:[#allocation11 + $0x54] sm:$0xf]
    %v1093 = vld [vmem:[#allocation11 + $0x58] sm:$0xf]
    %v1094 = vld [vmem:[#allocation11 + $0x5c] sm:$0xf]
    %v1095 = vld [vmem:[#allocation11 + $0x60] sm:$0xf]
    %v1096 = vld [vmem:[#allocation11 + $0x64] sm:$0xf]
    %v1097 = vld [vmem:[#allocation11 + $0x68] sm:$0xf]
    %v1098 = vld [vmem:[#allocation11 + $0x6c] sm:$0xf]
    %v1099 = vld [vmem:[#allocation11 + $0x70] sm:$0xf]
    %v1100 = vld [vmem:[#allocation11 + $0x74] sm:$0xf]
    %v1101 = vld [vmem:[#allocation11 + $0x78] sm:$0xf]
    %v1102 = vld [vmem:[#allocation11 + $0x7c] sm:$0xf]
    %v1103 = vld [vmem:[#allocation13] sm:$0xf]
    %v1104 = vld [vmem:[#allocation13 + $0x4] sm:$0xf]
    %v1105 = vld [vmem:[#allocation13 + $0x8] sm:$0xf]
    %v1106 = vld [vmem:[#allocation13 + $0xc] sm:$0xf]
    %v1107 = vld [vmem:[#allocation13 + $0x10] sm:$0xf]
    %v1108 = vld [vmem:[#allocation13 + $0x14] sm:$0xf]
    %v1109 = vld [vmem:[#allocation13 + $0x18] sm:$0xf]
    %v1110 = vld [vmem:[#allocation13 + $0x1c] sm:$0xf]
    %v1111 = vld [vmem:[#allocation13 + $0x20] sm:$0xf]
    %v1112 = vld [vmem:[#allocation13 + $0x24] sm:$0xf]
    %v1113 = vld [vmem:[#allocation13 + $0x28] sm:$0xf]
    %v1114 = vld [vmem:[#allocation13 + $0x2c] sm:$0xf]
    %v1115 = vld [vmem:[#allocation13 + $0x30] sm:$0xf]
    %v1116 = vld [vmem:[#allocation13 + $0x34] sm:$0xf]
    %v1117 = vld [vmem:[#allocation13 + $0x38] sm:$0xf]
    %v1118 = vld [vmem:[#allocation13 + $0x3c] sm:$0xf]
    %v1119 = vld [vmem:[#allocation13 + $0x40] sm:$0xf]
    %v1120 = vld [vmem:[#allocation13 + $0x44] sm:$0xf]
    %v1121 = vld [vmem:[#allocation13 + $0x48] sm:$0xf]
    %v1122 = vld [vmem:[#allocation13 + $0x4c] sm:$0xf]
    %v1123 = vld [vmem:[#allocation13 + $0x50] sm:$0xf]
    %v1124 = vld [vmem:[#allocation13 + $0x54] sm:$0xf]
    %v1125 = vld [vmem:[#allocation13 + $0x58] sm:$0xf]
    %v1126 = vld [vmem:[#allocation13 + $0x5c] sm:$0xf]
    %v1127 = vld [vmem:[#allocation13 + $0x60] sm:$0xf]
    %v1128 = vld [vmem:[#allocation13 + $0x64] sm:$0xf]
    %v1129 = vld [vmem:[#allocation13 + $0x68] sm:$0xf]
    %v1130 = vld [vmem:[#allocation13 + $0x6c] sm:$0xf]
    %v1131 = vld [vmem:[#allocation13 + $0x70] sm:$0xf]
    %v1132 = vld [vmem:[#allocation13 + $0x74] sm:$0xf]
    %v1133 = vld [vmem:[#allocation13 + $0x78] sm:$0xf]
    %v1134 = vld [vmem:[#allocation13 + $0x7c] sm:$0xf]
    %v1167 = vunpack.c.l.b16 %v1103
    %v1168 = vunpack.c.l.b16 %v1104
    %v1169 = vunpack.c.l.b16 %v1105
    %v1170 = vunpack.c.l.b16 %v1106
    %v1171 = vunpack.c.l.b16 %v1107
    %v1172 = vunpack.c.l.b16 %v1108
    %v1173 = vunpack.c.l.b16 %v1109
    %v1174 = vunpack.c.l.b16 %v1110
    %v1175 = vunpack.c.l.b16 %v1111
    %v1176 = vunpack.c.l.b16 %v1112
    %v1177 = vunpack.c.l.b16 %v1113
    %v1178 = vunpack.c.l.b16 %v1114
    %v1179 = vunpack.c.l.b16 %v1115
    %v1180 = vunpack.c.l.b16 %v1116
    %v1181 = vunpack.c.l.b16 %v1117
    %v1182 = vunpack.c.l.b16 %v1118
    %v1183 = vunpack.c.l.b16 %v1119
    %v1184 = vunpack.c.l.b16 %v1120
    %v1185 = vunpack.c.l.b16 %v1121
    %v1186 = vunpack.c.l.b16 %v1122
    %v1187 = vunpack.c.l.b16 %v1123
    %v1188 = vunpack.c.l.b16 %v1124
    %v1189 = vunpack.c.l.b16 %v1125
    %v1190 = vunpack.c.l.b16 %v1126
    %v1191 = vunpack.c.l.b16 %v1127
    %v1192 = vunpack.c.l.b16 %v1128
    %v1193 = vunpack.c.l.b16 %v1129
    %v1194 = vunpack.c.l.b16 %v1130
    %v1195 = vunpack.c.l.b16 %v1131
    %v1196 = vunpack.c.l.b16 %v1132
    %v1197 = vunpack.c.l.b16 %v1133
    %v1198 = vunpack.c.l.b16 %v1134
    %v1199 = vpack.c.b16 %v1168, %v1167
    %v1200 = vpack.c.b16 %v1170, %v1169
    %v1201 = vpack.c.b16 %v1172, %v1171
    %v1202 = vpack.c.b16 %v1174, %v1173
    %v1203 = vpack.c.b16 %v1176, %v1175
    %v1204 = vpack.c.b16 %v1178, %v1177
    %v1205 = vpack.c.b16 %v1180, %v1179
    %v1206 = vpack.c.b16 %v1182, %v1181
    %v1207 = vpack.c.b16 %v1184, %v1183
    %v1208 = vpack.c.b16 %v1186, %v1185
    %v1209 = vpack.c.b16 %v1188, %v1187
    %v1210 = vpack.c.b16 %v1190, %v1189
    %v1211 = vpack.c.b16 %v1192, %v1191
    %v1212 = vpack.c.b16 %v1194, %v1193
    %v1213 = vpack.c.b16 %v1196, %v1195
    %v1214 = vpack.c.b16 %v1198, %v1197
    %1231 = vmatprep.subr.bf16.mxu0 0
    %1232 = vmatpush1.bf16.msra.mxu0 %v1199
    %1233 = vmatprep.subr.bf16.mxu0 0
    %1234 = vmatpush1.bf16.msra.mxu0 %v1200
    %1235 = vmatprep.subr.bf16.mxu0 0
    %1236 = vmatpush1.bf16.msra.mxu0 %v1201
    %1237 = vmatprep.subr.bf16.mxu0 0
    %1238 = vmatpush1.bf16.msra.mxu0 %v1202
    %1239 = vmatprep.subr.bf16.mxu0 0
    %1240 = vmatpush1.bf16.msra.mxu0 %v1203
    %1241 = vmatprep.subr.bf16.mxu0 0
    %1242 = vmatpush1.bf16.msra.mxu0 %v1204
    %1243 = vmatprep.subr.bf16.mxu0 0
    %1244 = vmatpush1.bf16.msra.mxu0 %v1205
    %1245 = vmatprep.subr.bf16.mxu0 0
    %1246 = vmatpush1.bf16.msra.mxu0 %v1206
    %1247 = vmatprep.subr.bf16.mxu0 0
    %1248 = vmatpush1.bf16.msra.mxu0 %v1207
    %1249 = vmatprep.subr.bf16.mxu0 0
    %1250 = vmatpush1.bf16.msra.mxu0 %v1208
    %1251 = vmatprep.subr.bf16.mxu0 0
    %1252 = vmatpush1.bf16.msra.mxu0 %v1209
    %1253 = vmatprep.subr.bf16.mxu0 0
    %1254 = vmatpush1.bf16.msra.mxu0 %v1210
    %1255 = vmatprep.subr.bf16.mxu0 0
    %1256 = vmatpush1.bf16.msra.mxu0 %v1211
    %1257 = vmatprep.subr.bf16.mxu0 0
    %1258 = vmatpush1.bf16.msra.mxu0 %v1212
    %1259 = vmatprep.subr.bf16.mxu0 0
    %1260 = vmatpush1.bf16.msra.mxu0 %v1213
    %1261 = vmatprep.subr.bf16.mxu0 0
    %1262 = vmatpush1.bf16.msra.mxu0 %v1214
    %1263 = vmatprep.mubr.bf16.mxu0 %v1070
    %1264 = vmatmul.mubr.bf16.gmra.mrb[0].mxu0 %v1069
    %v1265 = vpop.f32.mrb[0].mxu0
    %v1266 = vadd.f32 0.0, %v1265
    %v1267 = vpop.f32.mrb[0].mxu0
    %v1268 = vpop.f32.mrb[0].mxu0
    %v1269 = vpop.f32.mrb[0].mxu0
    %1270 = vdwg.mxu0
    %v1303 = vunpack.c.l.b16 %v1071
    %v1304 = vunpack.c.l.b16 %v1072
    %v1305 = vunpack.c.l.b16 %v1073
    %v1306 = vunpack.c.l.b16 %v1074
    %v1307 = vunpack.c.l.b16 %v1075
    %v1308 = vunpack.c.l.b16 %v1076
    %v1309 = vunpack.c.l.b16 %v1077
    %v1310 = vunpack.c.l.b16 %v1078
    %v1311 = vunpack.c.l.b16 %v1079
    %v1312 = vunpack.c.l.b16 %v1080
    %v1313 = vunpack.c.l.b16 %v1081
    %v1314 = vunpack.c.l.b16 %v1082
    %v1315 = vunpack.c.l.b16 %v1083
    %v1316 = vunpack.c.l.b16 %v1084
    %v1317 = vunpack.c.l.b16 %v1085
    %v1318 = vunpack.c.l.b16 %v1086
    %v1319 = vunpack.c.l.b16 %v1087
    %v1320 = vunpack.c.l.b16 %v1088
    %v1321 = vunpack.c.l.b16 %v1089
    %v1322 = vunpack.c.l.b16 %v1090
    %v1323 = vunpack.c.l.b16 %v1091
    %v1324 = vunpack.c.l.b16 %v1092
    %v1325 = vunpack.c.l.b16 %v1093
    %v1326 = vunpack.c.l.b16 %v1094
    %v1327 = vunpack.c.l.b16 %v1095
    %v1328 = vunpack.c.l.b16 %v1096
    %v1329 = vunpack.c.l.b16 %v1097
    %v1330 = vunpack.c.l.b16 %v1098
    %v1331 = vunpack.c.l.b16 %v1099
    %v1332 = vunpack.c.l.b16 %v1100
    %v1333 = vunpack.c.l.b16 %v1101
    %v1334 = vunpack.c.l.b16 %v1102
    %v1335 = vpack.c.b16 %v1304, %v1303
    %v1336 = vpack.c.b16 %v1306, %v1305
    %v1337 = vpack.c.b16 %v1308, %v1307
    %v1338 = vpack.c.b16 %v1310, %v1309
    %v1339 = vpack.c.b16 %v1312, %v1311
    %v1340 = vpack.c.b16 %v1314, %v1313
    %v1341 = vpack.c.b16 %v1316, %v1315
    %v1342 = vpack.c.b16 %v1318, %v1317
    %v1343 = vpack.c.b16 %v1320, %v1319
    %v1344 = vpack.c.b16 %v1322, %v1321
    %v1345 = vpack.c.b16 %v1324, %v1323
    %v1346 = vpack.c.b16 %v1326, %v1325
    %v1347 = vpack.c.b16 %v1328, %v1327
    %v1348 = vpack.c.b16 %v1330, %v1329
    %v1349 = vpack.c.b16 %v1332, %v1331
    %v1350 = vpack.c.b16 %v1334, %v1333
    %1367 = vmatprep.subr.bf16.mxu0 0
    %1368 = vmatpush1.bf16.msra.mxu0 %v1335
    %1369 = vmatprep.subr.bf16.mxu0 0
    %1370 = vmatpush1.bf16.msra.mxu0 %v1336
    %1371 = vmatprep.subr.bf16.mxu0 0
    %1372 = vmatpush1.bf16.msra.mxu0 %v1337
    %1373 = vmatprep.subr.bf16.mxu0 0
    %1374 = vmatpush1.bf16.msra.mxu0 %v1338
    %1375 = vmatprep.subr.bf16.mxu0 0
    %1376 = vmatpush1.bf16.msra.mxu0 %v1339
    %1377 = vmatprep.subr.bf16.mxu0 0
    %1378 = vmatpush1.bf16.msra.mxu0 %v1340
    %1379 = vmatprep.subr.bf16.mxu0 0
    %1380 = vmatpush1.bf16.msra.mxu0 %v1341
    %1381 = vmatprep.subr.bf16.mxu0 0
    %1382 = vmatpush1.bf16.msra.mxu0 %v1342
    %1383 = vmatprep.subr.bf16.mxu0 0
    %1384 = vmatpush1.bf16.msra.mxu0 %v1343
    %1385 = vmatprep.subr.bf16.mxu0 0
    %1386 = vmatpush1.bf16.msra.mxu0 %v1344
    %1387 = vmatprep.subr.bf16.mxu0 0
    %1388 = vmatpush1.bf16.msra.mxu0 %v1345
    %1389 = vmatprep.subr.bf16.mxu0 0
    %1390 = vmatpush1.bf16.msra.mxu0 %v1346
    %1391 = vmatprep.subr.bf16.mxu0 0
    %1392 = vmatpush1.bf16.msra.mxu0 %v1347
    %1393 = vmatprep.subr.bf16.mxu0 0
    %1394 = vmatpush1.bf16.msra.mxu0 %v1348
    %1395 = vmatprep.subr.bf16.mxu0 0
    %1396 = vmatpush1.bf16.msra.mxu0 %v1349
    %1397 = vmatprep.subr.bf16.mxu0 0
    %1398 = vmatpush1.bf16.msra.mxu0 %v1350
    %1399 = vmatprep.mubr.bf16.mxu0 %v821
    %1400 = vmatmul.mubr.bf16.gmra.mrb[0].mxu0 %v820
    %v1401 = vpop.f32.mrb[0].mxu0
    %v1402 = vadd.f32 %v1266, %v1401
    %v1403 = vpop.f32.mrb[0].mxu0
    %v1404 = vpop.f32.mrb[0].mxu0
    %v1405 = vpop.f32.mrb[0].mxu0
    %1406 = vdwg.mxu0
    %v1407 = vld [vmem:[%s10] sm:$0x1]
    %v1409 = vlaneseq
    %v1410 = vshrl.u32 %v1409, 7
    %v1411 = vsub.s32 0, %v1410
    %v1412 = vrot.slane %v1407, %v1411
    %v1414 = vadd.f32 %v1402, %v1412
    %1415 = vst [vmem:[#allocation14] sm:$0xff] %v1414
    // Predicated region
    $region74: #{tpu_custom_call.1} parent=1 // pred_check
      _
    $region75: #{tpu_custom_call.1} parent=1 // pred_check_branch
      %1417 = sbr.rel (0) target = $region77
    $region76: #{tpu_custom_call.1} parent=1 // pred_region
      %s1419 = ssub.s32 128, 128
      %1420 = vsyncadd [#allocation4], %s1419
      %s1422 = sshll.u32 [#allocation14], 4
      %s1423 = int_to_ptr.vmem [resolvable:$true] %s1422
      %1425 = dma.vmem_to_hbm [thread:$0]  %s1423, 128, %s11, [#allocation4]
    $region77: #{tpu_custom_call.1} parent=1 // pred_fallthru
      _
    // Predicated region
    $region78: #{tpu_custom_call.1} parent=1 // pred_check
      _
    $region79: #{tpu_custom_call.1} parent=1 // pred_check_branch
      %1427 = sbr.rel (0) target = $region81
    $region80: #{tpu_custom_call.1} parent=1 // pred_region
      %1428 = dma.done [#allocation4], 128
    $region81: #{tpu_custom_call.1} parent=1 // pred_fallthru
      _
    %1429 = vsyncpa [#allocation3], 1
    %1430 = vsyncpa [#allocation6], 1
    %1431 = vsyncpa [#allocation9], 1
    %1432 = vsyncpa [#allocation12], 1
    %1433 = vsyncpa [#allocation4], 1

</llo_original>
